<compile_context>
chip_gen: v7x
topology: tpu7x:2x2x1
jax: 0.10.0
libtpu: 0.0.40
codegen_flags: <defaults>
</compile_context>

<pallas_src>
import jax
import jax.numpy as jnp
from jax.experimental import pallas as pl
from jax.experimental.pallas import tpu as pltpu

# ---- model hyper-parameters (small, consistent with the module) -------------
DIM = 3          # input point dimension
C_DIM = 16       # latent code dimension
HIDDEN = 32      # hidden size
N_BLOCKS = 5     # number of ResNet blocks
OUT_DIM = 4      # occupancy + RGB

B = 2            # batch
T = 8            # points per batch element
ROWS = B * T     # all points processed in one invocation


def decoder_kernel(p_ref, c_ref,
                   wp_ref, bp_ref,
                   wc_all_ref, bc_all_ref,
                   w0_ref, b0_ref,
                   w1_ref, b1_ref,
                   wo_t_ref, bo_ref,
                   out_ref):
    # p_ref: (ROWS, DIM)   c_ref: (ROWS, C_DIM)  (c already row-broadcast)

    # --- fc_p on the VPU: K=3 is far too small for the MXU -------------------
    p = p_ref[...]                                        # (ROWS, DIM)
    net = p[:, 0:1] * wp_ref[0:1, :] + bp_ref[...]        # (ROWS, HIDDEN)
    for k in range(1, DIM):
        net = net + p[:, k:k + 1] * wp_ref[k:k + 1, :]

    # --- fused latent conditioning: ONE dot for all 5 fc_c layers ------------
    # Independent of `net`, so it sits off the block-chain critical path.
    net_c_all = jnp.dot(c_ref[...], wc_all_ref[...],
                        preferred_element_type=jnp.float32) + bc_all_ref[...]
    # net_c_all: (ROWS, N_BLOCKS * HIDDEN)

    # --- 5 ResnetBlockFC blocks (identity shortcut, size_in==size_out) -------
    for n in range(N_BLOCKS):
        net = net + net_c_all[:, n * HIDDEN:(n + 1) * HIDDEN]
        h = jnp.dot(jax.nn.relu(net), w0_ref[n],
                    preferred_element_type=jnp.float32) + b0_ref[n]
        dx = jnp.dot(jax.nn.relu(h), w1_ref[n],
                     preferred_element_type=jnp.float32) + b1_ref[n]
        net = net + dx

    # --- fc_out on the VPU/XLU: 4 lane reductions instead of an N=4 MXU dot --
    rn = jax.nn.relu(net)                                 # (ROWS, HIDDEN)
    cols = [jnp.sum(rn * wo_t_ref[j:j + 1, :], axis=-1, keepdims=True)
            for j in range(OUT_DIM)]                      # OUT_DIM x (ROWS, 1)
    out = jnp.concatenate(cols, axis=-1) + bo_ref[...]    # (ROWS, OUT_DIM)

    # Single lane-dense-as-possible store of the whole result slab.
    out_ref[...] = out.astype(out_ref.dtype)


def decoder_forward(p, c, params):
    """p: (B, T, DIM) float32, c: (B, C_DIM) float32 -> (B, T, OUT_DIM)."""
    (wp, bp, wc, bc, w0, b0, w1, b1, wo, bo) = params

    # Layout plumbing in the wrapper (no compute hoisted out of the kernel):
    p_flat = p.reshape(ROWS, DIM)
    c_rows = jnp.repeat(c, T, axis=0)                      # (ROWS, C_DIM)
    wc_all = jnp.transpose(wc, (1, 0, 2)).reshape(C_DIM, N_BLOCKS * HIDDEN)
    bc_all = bc.reshape(1, N_BLOCKS * HIDDEN)
    wo_t = wo.T                                            # (OUT_DIM, HIDDEN)

    vmem = pl.BlockSpec(memory_space=pltpu.MemorySpace.VMEM)

    out_flat = pl.pallas_call(
        decoder_kernel,
        out_shape=jax.ShapeDtypeStruct((ROWS, OUT_DIM), jnp.float32),
        in_specs=[vmem] * 12,
        out_specs=vmem,
    )(p_flat, c_rows, wp, bp, wc_all, bc_all, w0, b0, w1, b1, wo_t, bo)

    return out_flat.reshape(B, T, OUT_DIM)


def init_params(key):
    """Deterministic synthetic weights. Matmul weights stored as (in, out)."""
    ks = jax.random.split(key, 12)
    s = 0.1
    wp = s * jax.random.normal(ks[0], (DIM, HIDDEN), jnp.float32)
    bp = s * jax.random.normal(ks[1], (1, HIDDEN), jnp.float32)
    wc = s * jax.random.normal(ks[2], (N_BLOCKS, C_DIM, HIDDEN), jnp.float32)
    bc = s * jax.random.normal(ks[3], (N_BLOCKS, 1, HIDDEN), jnp.float32)
    w0 = s * jax.random.normal(ks[4], (N_BLOCKS, HIDDEN, HIDDEN), jnp.float32)
    b0 = s * jax.random.normal(ks[5], (N_BLOCKS, 1, HIDDEN), jnp.float32)
    # ResnetBlockFC initializes fc_1.weight to zeros; keep small non-zero here
    # so the kernel exercises all matmuls (synthetic init, not a checkpoint).
    w1 = s * jax.random.normal(ks[6], (N_BLOCKS, HIDDEN, HIDDEN), jnp.float32)
    b1 = s * jax.random.normal(ks[7], (N_BLOCKS, 1, HIDDEN), jnp.float32)
    wo = s * jax.random.normal(ks[8], (HIDDEN, OUT_DIM), jnp.float32)
    bo = s * jax.random.normal(ks[9], (1, OUT_DIM), jnp.float32)
    return (wp, bp, wc, bc, w0, b0, w1, b1, wo, bo)


def reference_forward(p, c, params):
    """Pure-JAX reference of the PyTorch forward (batchwise=True, out_dim=4)."""
    (wp, bp, wc, bc, w0, b0, w1, b1, wo, bo) = params
    net = p @ wp + bp[0]                                  # (B, T, H)
    for n in range(N_BLOCKS):
        net_c = c @ wc[n] + bc[n][0]                      # (B, H)
        net = net + net_c[:, None, :]                     # unsqueeze(1)
        h = jax.nn.relu(net) @ w0[n] + b0[n][0]
        dx = jax.nn.relu(h) @ w1[n] + b1[n][0]
        net = net + dx
    out = jax.nn.relu(net) @ wo + bo[0]                   # (B, T, OUT_DIM)
    return out                                            # squeeze(-1) no-op (OUT_DIM=4)


if __name__ == "__main__":
    key = jax.random.PRNGKey(0)
    kp, kc, kw = jax.random.split(key, 3)
    p = jax.random.normal(kp, (B, T, DIM), jnp.float32)
    c = jax.random.normal(kc, (B, C_DIM), jnp.float32)
    params = init_params(kw)

    out = decoder_forward(p, c, params)
    out = jax.block_until_ready(out)

    ref = reference_forward(p, c, params)
    assert out.shape == (B, T, OUT_DIM)
    assert jnp.allclose(out, ref, atol=1e-4, rtol=1e-4)
    print("KERNEL_OK")
</pallas_src>

<mosaic_0001>
module attributes {stable_mosaic.version = 11 : i64} {
  func.func @decoder_kernel(%arg0: memref<16x3xf32, #tpu.memory_space<vmem>>, %arg1: memref<16x16xf32, #tpu.memory_space<vmem>>, %arg2: memref<3x32xf32, #tpu.memory_space<vmem>>, %arg3: memref<1x32xf32, #tpu.memory_space<vmem>>, %arg4: memref<16x160xf32, #tpu.memory_space<vmem>>, %arg5: memref<1x160xf32, #tpu.memory_space<vmem>>, %arg6: memref<5x32x32xf32, #tpu.memory_space<vmem>>, %arg7: memref<5x1x32xf32, #tpu.memory_space<vmem>>, %arg8: memref<5x32x32xf32, #tpu.memory_space<vmem>>, %arg9: memref<5x1x32xf32, #tpu.memory_space<vmem>>, %arg10: memref<4x32xf32, #tpu.memory_space<vmem>>, %arg11: memref<1x4xf32, #tpu.memory_space<vmem>>, %arg12: memref<16x4xf32, #tpu.memory_space<vmem>>) attributes {dimension_semantics = [], scalar_prefetch = 0 : i64, scratch_operands = 0 : i64, tpu.core_type = #tpu.core_type<tc>} {
    %c0 = arith.constant 0 : index
    %c0_0 = arith.constant 0 : index
    %0 = vector.load %arg0[%c0, %c0_0] : memref<16x3xf32, #tpu.memory_space<vmem>>, vector<16x3xf32>
    %1 = vector.extract_strided_slice %0 {offsets = [0, 0], sizes = [16, 1], strides = [1, 1]} : vector<16x3xf32> to vector<16x1xf32>
    %c0_1 = arith.constant 0 : index
    %c0_2 = arith.constant 0 : index
    %2 = vector.load %arg2[%c0_1, %c0_2] : memref<3x32xf32, #tpu.memory_space<vmem>>, vector<1x32xf32>
    %3 = vector.broadcast %1 : vector<16x1xf32> to vector<16x32xf32>
    %4 = vector.broadcast %2 : vector<1x32xf32> to vector<16x32xf32>
    %5 = arith.mulf %3, %4 : vector<16x32xf32>
    %c0_3 = arith.constant 0 : index
    %c0_4 = arith.constant 0 : index
    %6 = vector.load %arg3[%c0_3, %c0_4] : memref<1x32xf32, #tpu.memory_space<vmem>>, vector<1x32xf32>
    %7 = vector.broadcast %6 : vector<1x32xf32> to vector<16x32xf32>
    %8 = arith.addf %5, %7 : vector<16x32xf32>
    %9 = vector.extract_strided_slice %0 {offsets = [0, 1], sizes = [16, 1], strides = [1, 1]} : vector<16x3xf32> to vector<16x1xf32>
    %c1 = arith.constant 1 : index
    %c0_5 = arith.constant 0 : index
    %10 = vector.load %arg2[%c1, %c0_5] : memref<3x32xf32, #tpu.memory_space<vmem>>, vector<1x32xf32>
    %11 = vector.broadcast %9 : vector<16x1xf32> to vector<16x32xf32>
    %12 = vector.broadcast %10 : vector<1x32xf32> to vector<16x32xf32>
    %13 = arith.mulf %11, %12 : vector<16x32xf32>
    %14 = arith.addf %8, %13 : vector<16x32xf32>
    %15 = vector.extract_strided_slice %0 {offsets = [0, 2], sizes = [16, 1], strides = [1, 1]} : vector<16x3xf32> to vector<16x1xf32>
    %c2 = arith.constant 2 : index
    %c0_6 = arith.constant 0 : index
    %16 = vector.load %arg2[%c2, %c0_6] : memref<3x32xf32, #tpu.memory_space<vmem>>, vector<1x32xf32>
    %17 = vector.broadcast %15 : vector<16x1xf32> to vector<16x32xf32>
    %18 = vector.broadcast %16 : vector<1x32xf32> to vector<16x32xf32>
    %19 = arith.mulf %17, %18 : vector<16x32xf32>
    %20 = arith.addf %14, %19 : vector<16x32xf32>
    %c0_7 = arith.constant 0 : index
    %c0_8 = arith.constant 0 : index
    %21 = vector.load %arg1[%c0_7, %c0_8] : memref<16x16xf32, #tpu.memory_space<vmem>>, vector<16x16xf32>
    %c0_9 = arith.constant 0 : index
    %c0_10 = arith.constant 0 : index
    %22 = vector.load %arg4[%c0_9, %c0_10] : memref<16x160xf32, #tpu.memory_space<vmem>>, vector<16x160xf32>
    %cst = arith.constant dense<0.000000e+00> : vector<16x160xf32>
    %23 = tpu.matmul %21, %22, %cst {dimension_numbers = #tpu.dot_dimension_numbers<[1], [0], [0], [1], [0, 0, 1, 1], [], []>} : vector<16x16xf32>, vector<16x160xf32>, vector<16x160xf32> -> vector<16x160xf32>
    %c0_11 = arith.constant 0 : index
    %c0_12 = arith.constant 0 : index
    %24 = vector.load %arg5[%c0_11, %c0_12] : memref<1x160xf32, #tpu.memory_space<vmem>>, vector<1x160xf32>
    %25 = vector.broadcast %24 : vector<1x160xf32> to vector<16x160xf32>
    %26 = arith.addf %23, %25 : vector<16x160xf32>
    %27 = vector.extract_strided_slice %26 {offsets = [0, 0], sizes = [16, 32], strides = [1, 1]} : vector<16x160xf32> to vector<16x32xf32>
    %28 = arith.addf %20, %27 : vector<16x32xf32>
    %cst_13 = arith.constant 0.000000e+00 : f32
    %29 = vector.broadcast %cst_13 : f32 to vector<16x32xf32>
    %30 = arith.maximumf %28, %29 : vector<16x32xf32>
    %c0_14 = arith.constant 0 : index
    %c0_15 = arith.constant 0 : index
    %c0_16 = arith.constant 0 : index
    %31 = vector.load %arg6[%c0_14, %c0_15, %c0_16] : memref<5x32x32xf32, #tpu.memory_space<vmem>>, vector<1x32x32xf32>
    %32 = vector.shape_cast %31 : vector<1x32x32xf32> to vector<32x32xf32>
    %cst_17 = arith.constant dense<0.000000e+00> : vector<16x32xf32>
    %33 = tpu.matmul %30, %32, %cst_17 {dimension_numbers = #tpu.dot_dimension_numbers<[1], [0], [0], [1], [0, 0, 1, 1], [], []>} : vector<16x32xf32>, vector<32x32xf32>, vector<16x32xf32> -> vector<16x32xf32>
    %c0_18 = arith.constant 0 : index
    %c0_19 = arith.constant 0 : index
    %c0_20 = arith.constant 0 : index
    %34 = vector.load %arg7[%c0_18, %c0_19, %c0_20] : memref<5x1x32xf32, #tpu.memory_space<vmem>>, vector<1x1x32xf32>
    %35 = vector.shape_cast %34 : vector<1x1x32xf32> to vector<1x32xf32>
    %36 = vector.broadcast %35 : vector<1x32xf32> to vector<16x32xf32>
    %37 = arith.addf %33, %36 : vector<16x32xf32>
    %cst_21 = arith.constant 0.000000e+00 : f32
    %38 = vector.broadcast %cst_21 : f32 to vector<16x32xf32>
    %39 = arith.maximumf %37, %38 : vector<16x32xf32>
    %c0_22 = arith.constant 0 : index
    %c0_23 = arith.constant 0 : index
    %c0_24 = arith.constant 0 : index
    %40 = vector.load %arg8[%c0_22, %c0_23, %c0_24] : memref<5x32x32xf32, #tpu.memory_space<vmem>>, vector<1x32x32xf32>
    %41 = vector.shape_cast %40 : vector<1x32x32xf32> to vector<32x32xf32>
    %cst_25 = arith.constant dense<0.000000e+00> : vector<16x32xf32>
    %42 = tpu.matmul %39, %41, %cst_25 {dimension_numbers = #tpu.dot_dimension_numbers<[1], [0], [0], [1], [0, 0, 1, 1], [], []>} : vector<16x32xf32>, vector<32x32xf32>, vector<16x32xf32> -> vector<16x32xf32>
    %c0_26 = arith.constant 0 : index
    %c0_27 = arith.constant 0 : index
    %c0_28 = arith.constant 0 : index
    %43 = vector.load %arg9[%c0_26, %c0_27, %c0_28] : memref<5x1x32xf32, #tpu.memory_space<vmem>>, vector<1x1x32xf32>
    %44 = vector.shape_cast %43 : vector<1x1x32xf32> to vector<1x32xf32>
    %45 = vector.broadcast %44 : vector<1x32xf32> to vector<16x32xf32>
    %46 = arith.addf %42, %45 : vector<16x32xf32>
    %47 = arith.addf %28, %46 : vector<16x32xf32>
    %48 = vector.extract_strided_slice %26 {offsets = [0, 32], sizes = [16, 32], strides = [1, 1]} : vector<16x160xf32> to vector<16x32xf32>
    %49 = arith.addf %47, %48 : vector<16x32xf32>
    %cst_29 = arith.constant 0.000000e+00 : f32
    %50 = vector.broadcast %cst_29 : f32 to vector<16x32xf32>
    %51 = arith.maximumf %49, %50 : vector<16x32xf32>
    %c1_30 = arith.constant 1 : index
    %c0_31 = arith.constant 0 : index
    %c0_32 = arith.constant 0 : index
    %52 = vector.load %arg6[%c1_30, %c0_31, %c0_32] : memref<5x32x32xf32, #tpu.memory_space<vmem>>, vector<1x32x32xf32>
    %53 = vector.shape_cast %52 : vector<1x32x32xf32> to vector<32x32xf32>
    %cst_33 = arith.constant dense<0.000000e+00> : vector<16x32xf32>
    %54 = tpu.matmul %51, %53, %cst_33 {dimension_numbers = #tpu.dot_dimension_numbers<[1], [0], [0], [1], [0, 0, 1, 1], [], []>} : vector<16x32xf32>, vector<32x32xf32>, vector<16x32xf32> -> vector<16x32xf32>
    %c1_34 = arith.constant 1 : index
    %c0_35 = arith.constant 0 : index
    %c0_36 = arith.constant 0 : index
    %55 = vector.load %arg7[%c1_34, %c0_35, %c0_36] : memref<5x1x32xf32, #tpu.memory_space<vmem>>, vector<1x1x32xf32>
    %56 = vector.shape_cast %55 : vector<1x1x32xf32> to vector<1x32xf32>
    %57 = vector.broadcast %56 : vector<1x32xf32> to vector<16x32xf32>
    %58 = arith.addf %54, %57 : vector<16x32xf32>
    %cst_37 = arith.constant 0.000000e+00 : f32
    %59 = vector.broadcast %cst_37 : f32 to vector<16x32xf32>
    %60 = arith.maximumf %58, %59 : vector<16x32xf32>
    %c1_38 = arith.constant 1 : index
    %c0_39 = arith.constant 0 : index
    %c0_40 = arith.constant 0 : index
    %61 = vector.load %arg8[%c1_38, %c0_39, %c0_40] : memref<5x32x32xf32, #tpu.memory_space<vmem>>, vector<1x32x32xf32>
    %62 = vector.shape_cast %61 : vector<1x32x32xf32> to vector<32x32xf32>
    %cst_41 = arith.constant dense<0.000000e+00> : vector<16x32xf32>
    %63 = tpu.matmul %60, %62, %cst_41 {dimension_numbers = #tpu.dot_dimension_numbers<[1], [0], [0], [1], [0, 0, 1, 1], [], []>} : vector<16x32xf32>, vector<32x32xf32>, vector<16x32xf32> -> vector<16x32xf32>
    %c1_42 = arith.constant 1 : index
    %c0_43 = arith.constant 0 : index
    %c0_44 = arith.constant 0 : index
    %64 = vector.load %arg9[%c1_42, %c0_43, %c0_44] : memref<5x1x32xf32, #tpu.memory_space<vmem>>, vector<1x1x32xf32>
    %65 = vector.shape_cast %64 : vector<1x1x32xf32> to vector<1x32xf32>
    %66 = vector.broadcast %65 : vector<1x32xf32> to vector<16x32xf32>
    %67 = arith.addf %63, %66 : vector<16x32xf32>
    %68 = arith.addf %49, %67 : vector<16x32xf32>
    %69 = vector.extract_strided_slice %26 {offsets = [0, 64], sizes = [16, 32], strides = [1, 1]} : vector<16x160xf32> to vector<16x32xf32>
    %70 = arith.addf %68, %69 : vector<16x32xf32>
    %cst_45 = arith.constant 0.000000e+00 : f32
    %71 = vector.broadcast %cst_45 : f32 to vector<16x32xf32>
    %72 = arith.maximumf %70, %71 : vector<16x32xf32>
    %c2_46 = arith.constant 2 : index
    %c0_47 = arith.constant 0 : index
    %c0_48 = arith.constant 0 : index
    %73 = vector.load %arg6[%c2_46, %c0_47, %c0_48] : memref<5x32x32xf32, #tpu.memory_space<vmem>>, vector<1x32x32xf32>
    %74 = vector.shape_cast %73 : vector<1x32x32xf32> to vector<32x32xf32>
    %cst_49 = arith.constant dense<0.000000e+00> : vector<16x32xf32>
    %75 = tpu.matmul %72, %74, %cst_49 {dimension_numbers = #tpu.dot_dimension_numbers<[1], [0], [0], [1], [0, 0, 1, 1], [], []>} : vector<16x32xf32>, vector<32x32xf32>, vector<16x32xf32> -> vector<16x32xf32>
    %c2_50 = arith.constant 2 : index
    %c0_51 = arith.constant 0 : index
    %c0_52 = arith.constant 0 : index
    %76 = vector.load %arg7[%c2_50, %c0_51, %c0_52] : memref<5x1x32xf32, #tpu.memory_space<vmem>>, vector<1x1x32xf32>
    %77 = vector.shape_cast %76 : vector<1x1x32xf32> to vector<1x32xf32>
    %78 = vector.broadcast %77 : vector<1x32xf32> to vector<16x32xf32>
    %79 = arith.addf %75, %78 : vector<16x32xf32>
    %cst_53 = arith.constant 0.000000e+00 : f32
    %80 = vector.broadcast %cst_53 : f32 to vector<16x32xf32>
    %81 = arith.maximumf %79, %80 : vector<16x32xf32>
    %c2_54 = arith.constant 2 : index
    %c0_55 = arith.constant 0 : index
    %c0_56 = arith.constant 0 : index
    %82 = vector.load %arg8[%c2_54, %c0_55, %c0_56] : memref<5x32x32xf32, #tpu.memory_space<vmem>>, vector<1x32x32xf32>
    %83 = vector.shape_cast %82 : vector<1x32x32xf32> to vector<32x32xf32>
    %cst_57 = arith.constant dense<0.000000e+00> : vector<16x32xf32>
    %84 = tpu.matmul %81, %83, %cst_57 {dimension_numbers = #tpu.dot_dimension_numbers<[1], [0], [0], [1], [0, 0, 1, 1], [], []>} : vector<16x32xf32>, vector<32x32xf32>, vector<16x32xf32> -> vector<16x32xf32>
    %c2_58 = arith.constant 2 : index
    %c0_59 = arith.constant 0 : index
    %c0_60 = arith.constant 0 : index
    %85 = vector.load %arg9[%c2_58, %c0_59, %c0_60] : memref<5x1x32xf32, #tpu.memory_space<vmem>>, vector<1x1x32xf32>
    %86 = vector.shape_cast %85 : vector<1x1x32xf32> to vector<1x32xf32>
    %87 = vector.broadcast %86 : vector<1x32xf32> to vector<16x32xf32>
    %88 = arith.addf %84, %87 : vector<16x32xf32>
    %89 = arith.addf %70, %88 : vector<16x32xf32>
    %90 = vector.extract_strided_slice %26 {offsets = [0, 96], sizes = [16, 32], strides = [1, 1]} : vector<16x160xf32> to vector<16x32xf32>
    %91 = arith.addf %89, %90 : vector<16x32xf32>
    %cst_61 = arith.constant 0.000000e+00 : f32
    %92 = vector.broadcast %cst_61 : f32 to vector<16x32xf32>
    %93 = arith.maximumf %91, %92 : vector<16x32xf32>
    %c3 = arith.constant 3 : index
    %c0_62 = arith.constant 0 : index
    %c0_63 = arith.constant 0 : index
    %94 = vector.load %arg6[%c3, %c0_62, %c0_63] : memref<5x32x32xf32, #tpu.memory_space<vmem>>, vector<1x32x32xf32>
    %95 = vector.shape_cast %94 : vector<1x32x32xf32> to vector<32x32xf32>
    %cst_64 = arith.constant dense<0.000000e+00> : vector<16x32xf32>
    %96 = tpu.matmul %93, %95, %cst_64 {dimension_numbers = #tpu.dot_dimension_numbers<[1], [0], [0], [1], [0, 0, 1, 1], [], []>} : vector<16x32xf32>, vector<32x32xf32>, vector<16x32xf32> -> vector<16x32xf32>
    %c3_65 = arith.constant 3 : index
    %c0_66 = arith.constant 0 : index
    %c0_67 = arith.constant 0 : index
    %97 = vector.load %arg7[%c3_65, %c0_66, %c0_67] : memref<5x1x32xf32, #tpu.memory_space<vmem>>, vector<1x1x32xf32>
    %98 = vector.shape_cast %97 : vector<1x1x32xf32> to vector<1x32xf32>
    %99 = vector.broadcast %98 : vector<1x32xf32> to vector<16x32xf32>
    %100 = arith.addf %96, %99 : vector<16x32xf32>
    %cst_68 = arith.constant 0.000000e+00 : f32
    %101 = vector.broadcast %cst_68 : f32 to vector<16x32xf32>
    %102 = arith.maximumf %100, %101 : vector<16x32xf32>
    %c3_69 = arith.constant 3 : index
    %c0_70 = arith.constant 0 : index
    %c0_71 = arith.constant 0 : index
    %103 = vector.load %arg8[%c3_69, %c0_70, %c0_71] : memref<5x32x32xf32, #tpu.memory_space<vmem>>, vector<1x32x32xf32>
    %104 = vector.shape_cast %103 : vector<1x32x32xf32> to vector<32x32xf32>
    %cst_72 = arith.constant dense<0.000000e+00> : vector<16x32xf32>
    %105 = tpu.matmul %102, %104, %cst_72 {dimension_numbers = #tpu.dot_dimension_numbers<[1], [0], [0], [1], [0, 0, 1, 1], [], []>} : vector<16x32xf32>, vector<32x32xf32>, vector<16x32xf32> -> vector<16x32xf32>
    %c3_73 = arith.constant 3 : index
    %c0_74 = arith.constant 0 : index
    %c0_75 = arith.constant 0 : index
    %106 = vector.load %arg9[%c3_73, %c0_74, %c0_75] : memref<5x1x32xf32, #tpu.memory_space<vmem>>, vector<1x1x32xf32>
    %107 = vector.shape_cast %106 : vector<1x1x32xf32> to vector<1x32xf32>
    %108 = vector.broadcast %107 : vector<1x32xf32> to vector<16x32xf32>
    %109 = arith.addf %105, %108 : vector<16x32xf32>
    %110 = arith.addf %91, %109 : vector<16x32xf32>
    %111 = vector.extract_strided_slice %26 {offsets = [0, 128], sizes = [16, 32], strides = [1, 1]} : vector<16x160xf32> to vector<16x32xf32>
    %112 = arith.addf %110, %111 : vector<16x32xf32>
    %cst_76 = arith.constant 0.000000e+00 : f32
    %113 = vector.broadcast %cst_76 : f32 to vector<16x32xf32>
    %114 = arith.maximumf %112, %113 : vector<16x32xf32>
    %c4 = arith.constant 4 : index
    %c0_77 = arith.constant 0 : index
    %c0_78 = arith.constant 0 : index
    %115 = vector.load %arg6[%c4, %c0_77, %c0_78] : memref<5x32x32xf32, #tpu.memory_space<vmem>>, vector<1x32x32xf32>
    %116 = vector.shape_cast %115 : vector<1x32x32xf32> to vector<32x32xf32>
    %cst_79 = arith.constant dense<0.000000e+00> : vector<16x32xf32>
    %117 = tpu.matmul %114, %116, %cst_79 {dimension_numbers = #tpu.dot_dimension_numbers<[1], [0], [0], [1], [0, 0, 1, 1], [], []>} : vector<16x32xf32>, vector<32x32xf32>, vector<16x32xf32> -> vector<16x32xf32>
    %c4_80 = arith.constant 4 : index
    %c0_81 = arith.constant 0 : index
    %c0_82 = arith.constant 0 : index
    %118 = vector.load %arg7[%c4_80, %c0_81, %c0_82] : memref<5x1x32xf32, #tpu.memory_space<vmem>>, vector<1x1x32xf32>
    %119 = vector.shape_cast %118 : vector<1x1x32xf32> to vector<1x32xf32>
    %120 = vector.broadcast %119 : vector<1x32xf32> to vector<16x32xf32>
    %121 = arith.addf %117, %120 : vector<16x32xf32>
    %cst_83 = arith.constant 0.000000e+00 : f32
    %122 = vector.broadcast %cst_83 : f32 to vector<16x32xf32>
    %123 = arith.maximumf %121, %122 : vector<16x32xf32>
    %c4_84 = arith.constant 4 : index
    %c0_85 = arith.constant 0 : index
    %c0_86 = arith.constant 0 : index
    %124 = vector.load %arg8[%c4_84, %c0_85, %c0_86] : memref<5x32x32xf32, #tpu.memory_space<vmem>>, vector<1x32x32xf32>
    %125 = vector.shape_cast %124 : vector<1x32x32xf32> to vector<32x32xf32>
    %cst_87 = arith.constant dense<0.000000e+00> : vector<16x32xf32>
    %126 = tpu.matmul %123, %125, %cst_87 {dimension_numbers = #tpu.dot_dimension_numbers<[1], [0], [0], [1], [0, 0, 1, 1], [], []>} : vector<16x32xf32>, vector<32x32xf32>, vector<16x32xf32> -> vector<16x32xf32>
    %c4_88 = arith.constant 4 : index
    %c0_89 = arith.constant 0 : index
    %c0_90 = arith.constant 0 : index
    %127 = vector.load %arg9[%c4_88, %c0_89, %c0_90] : memref<5x1x32xf32, #tpu.memory_space<vmem>>, vector<1x1x32xf32>
    %128 = vector.shape_cast %127 : vector<1x1x32xf32> to vector<1x32xf32>
    %129 = vector.broadcast %128 : vector<1x32xf32> to vector<16x32xf32>
    %130 = arith.addf %126, %129 : vector<16x32xf32>
    %131 = arith.addf %112, %130 : vector<16x32xf32>
    %cst_91 = arith.constant 0.000000e+00 : f32
    %132 = vector.broadcast %cst_91 : f32 to vector<16x32xf32>
    %133 = arith.maximumf %131, %132 : vector<16x32xf32>
    %c0_92 = arith.constant 0 : index
    %c0_93 = arith.constant 0 : index
    %134 = vector.load %arg10[%c0_92, %c0_93] : memref<4x32xf32, #tpu.memory_space<vmem>>, vector<1x32xf32>
    %135 = vector.broadcast %134 : vector<1x32xf32> to vector<16x32xf32>
    %136 = arith.mulf %133, %135 : vector<16x32xf32>
    %cst_94 = arith.constant dense<0.000000e+00> : vector<16xf32>
    %137 = vector.multi_reduction <add>, %136, %cst_94 [1] : vector<16x32xf32> to vector<16xf32>
    %138 = vector.shape_cast %137 : vector<16xf32> to vector<16x1xf32>
    %c1_95 = arith.constant 1 : index
    %c0_96 = arith.constant 0 : index
    %139 = vector.load %arg10[%c1_95, %c0_96] : memref<4x32xf32, #tpu.memory_space<vmem>>, vector<1x32xf32>
    %140 = vector.broadcast %139 : vector<1x32xf32> to vector<16x32xf32>
    %141 = arith.mulf %133, %140 : vector<16x32xf32>
    %cst_97 = arith.constant dense<0.000000e+00> : vector<16xf32>
    %142 = vector.multi_reduction <add>, %141, %cst_97 [1] : vector<16x32xf32> to vector<16xf32>
    %143 = vector.shape_cast %142 : vector<16xf32> to vector<16x1xf32>
    %c2_98 = arith.constant 2 : index
    %c0_99 = arith.constant 0 : index
    %144 = vector.load %arg10[%c2_98, %c0_99] : memref<4x32xf32, #tpu.memory_space<vmem>>, vector<1x32xf32>
    %145 = vector.broadcast %144 : vector<1x32xf32> to vector<16x32xf32>
    %146 = arith.mulf %133, %145 : vector<16x32xf32>
    %cst_100 = arith.constant dense<0.000000e+00> : vector<16xf32>
    %147 = vector.multi_reduction <add>, %146, %cst_100 [1] : vector<16x32xf32> to vector<16xf32>
    %148 = vector.shape_cast %147 : vector<16xf32> to vector<16x1xf32>
    %c3_101 = arith.constant 3 : index
    %c0_102 = arith.constant 0 : index
    %149 = vector.load %arg10[%c3_101, %c0_102] : memref<4x32xf32, #tpu.memory_space<vmem>>, vector<1x32xf32>
    %150 = vector.broadcast %149 : vector<1x32xf32> to vector<16x32xf32>
    %151 = arith.mulf %133, %150 : vector<16x32xf32>
    %cst_103 = arith.constant dense<0.000000e+00> : vector<16xf32>
    %152 = vector.multi_reduction <add>, %151, %cst_103 [1] : vector<16x32xf32> to vector<16xf32>
    %153 = vector.shape_cast %152 : vector<16xf32> to vector<16x1xf32>
    %154 = tpu.concatenate %138, %143, %148, %153 in 1 : vector<16x1xf32>, vector<16x1xf32>, vector<16x1xf32>, vector<16x1xf32> -> vector<16x4xf32>
    %c0_104 = arith.constant 0 : index
    %c0_105 = arith.constant 0 : index
    %155 = vector.load %arg11[%c0_104, %c0_105] : memref<1x4xf32, #tpu.memory_space<vmem>>, vector<1x4xf32>
    %156 = vector.broadcast %155 : vector<1x4xf32> to vector<16x4xf32>
    %157 = arith.addf %154, %156 : vector<16x4xf32>
    %c0_106 = arith.constant 0 : index
    %c0_107 = arith.constant 0 : index
    %158 = vector.load %arg12[%c0_106, %c0_107] : memref<16x4xf32, #tpu.memory_space<vmem>>, vector<16x4xf32>
    tpu.vector_store %arg12[%c0_106, %c0_107], %157 {strides = array<i32>} : memref<16x4xf32, #tpu.memory_space<vmem>>, vector<16x4xf32>,
    return
  }
}

</mosaic_0001>

<llo_original>
// kernel: tpu_custom_call.1
$region0: #{tpu_custom_call.1}
  #allocation0 [shape = 'u32[]', space=smem, size = 0x4, offset = 0x4, fixed_abs, tag = 'smem constant byte address 0x4 - core index']
  #allocation1 [shape = 'u32[144,128]{1,0:T(1,128)}', space=vmem, size = 0x12000, scoped, tag = 'internal scratch']
  %s0 = inlined_call_operand.vmem [shape: f32[16,3], index: 0, kind: input, shape index: {}]
  %s1 = inlined_call_operand.hbm [shape: f32[16,16], index: 1, kind: input, shape index: {}]
  %s2 = inlined_call_operand.hbm [shape: f32[3,32], index: 2, kind: input, shape index: {}]
  %s3 = inlined_call_operand.hbm [shape: f32[1,32], index: 3, kind: input, shape index: {}]
  %s4 = inlined_call_operand.vmem [shape: f32[16,160], index: 4, kind: input, shape index: {}]
  %s5 = inlined_call_operand.hbm [shape: f32[1,160], index: 5, kind: input, shape index: {}]
  %s6 = inlined_call_operand.hbm [shape: f32[5,32,32], index: 6, kind: input, shape index: {}]
  %s7 = inlined_call_operand.vmem [shape: f32[5,1,32], index: 7, kind: input, shape index: {}]
  %s8 = inlined_call_operand.hbm [shape: f32[5,32,32], index: 8, kind: input, shape index: {}]
  %s9 = inlined_call_operand.vmem [shape: f32[5,1,32], index: 9, kind: input, shape index: {}]
  %s10 = inlined_call_operand.vmem [shape: f32[4,32], index: 10, kind: input, shape index: {}]
  %s11 = inlined_call_operand.vmem [shape: f32[1,4], index: 11, kind: input, shape index: {}]
  %s12 = inlined_call_operand.vmem [shape: f32[16,4], index: 12, kind: output, shape index: {}]
  %s13 = sld [smem:[#allocation0]]
  $region82: #{tpu_custom_call.1} parent=0
    _
  %s15 = ssub.s32 1, %s13
  %s16 = scalar_select 0, %s15, %s13
  $region1: #{tpu_custom_call.1} parent=0
    #allocation2 [shape = 'u8[8192]{0}', space=vmem, size = 0x2000, scoped, tag = 'input window, operand 1, single buffered']
    #allocation3 [shape = 's32[1]{0}', space=sflag, size = 0x4, scoped, tag = 'scoped memory for tpu_custom_call.1']
    #allocation4 [shape = 'u8[2048]{0}', space=vmem, size = 0x800, scoped, tag = 'input window, operand 2, single buffered']
    #allocation5 [shape = 's32[1]{0}', space=sflag, size = 0x4, scoped, tag = 'scoped memory for tpu_custom_call.1']
    #allocation6 [shape = 'u8[512]{0}', space=vmem, size = 0x400, scoped, tag = 'input window, operand 3, single buffered']
    #allocation7 [shape = 'u8[1024]{0}', space=vmem, size = 0x400, scoped, tag = 'input window, operand 5, single buffered']
    #allocation8 [shape = 's32[1]{0}', space=sflag, size = 0x4, scoped, tag = 'scoped memory for tpu_custom_call.1']
    #allocation9 [shape = 'u8[81920]{0}', space=vmem, size = 0x14000, scoped, tag = 'input window, operand 6, single buffered']
    #allocation10 [shape = 'u8[81920]{0}', space=vmem, size = 0x14000, scoped, tag = 'input window, operand 8, single buffered']
    #allocation11 [shape = 's32[1]{0}', space=sflag, size = 0x4, scoped, tag = 'scoped memory for tpu_custom_call.1']
    %17 = vsyncpa [#allocation3], 0
    %18 = vsyncpa [#allocation5], 0
    %19 = vsyncpa [#allocation8], 0
    %20 = vsyncpa [#allocation11], 0
    // Predicated region
    $region2: #{tpu_custom_call.1} parent=1 // pred_check
      _
    $region3: #{tpu_custom_call.1} parent=1 // pred_check_branch
      %22 = sbr.rel (0) target = $region5
    $region4: #{tpu_custom_call.1} parent=1 // pred_region
      _
    $region5: #{tpu_custom_call.1} parent=1 // pred_fallthru
      _
    // Predicated region
    $region6: #{tpu_custom_call.1} parent=1 // pred_check
      _
    $region7: #{tpu_custom_call.1} parent=1 // pred_check_branch
      %24 = sbr.rel (0) target = $region9
    $region8: #{tpu_custom_call.1} parent=1 // pred_region
      %s26 = ssub.s32 256, 256
      %27 = vsyncadd [#allocation3], %s26
      %s28 = sshll.u32 [#allocation2], 4
      %s29 = int_to_ptr.vmem [resolvable:$true] %s28
      %34 = dma.hbm_to_vmem [thread:$0]  %s1, 256, %s29, [#allocation3], 128, 128, 8
    $region9: #{tpu_custom_call.1} parent=1 // pred_fallthru
      _
    // Predicated region
    $region10: #{tpu_custom_call.1} parent=1 // pred_check
      _
    $region11: #{tpu_custom_call.1} parent=1 // pred_check_branch
      %36 = sbr.rel (0) target = $region13
    $region12: #{tpu_custom_call.1} parent=1 // pred_region
      %s38 = ssub.s32 64, 64
      %39 = vsyncadd [#allocation5], %s38
      %s41 = sshll.u32 [#allocation4], 4
      %s42 = int_to_ptr.vmem [resolvable:$true] %s41
      %44 = dma.hbm_to_vmem [thread:$0]  %s2, 64, %s42, [#allocation5]
    $region13: #{tpu_custom_call.1} parent=1 // pred_fallthru
      _
    // Predicated region
    $region14: #{tpu_custom_call.1} parent=1 // pred_check
      _
    $region15: #{tpu_custom_call.1} parent=1 // pred_check_branch
      %46 = sbr.rel (0) target = $region17
    $region16: #{tpu_custom_call.1} parent=1 // pred_region
      %s48 = ssub.s32 16, 16
      %49 = vsyncadd [#allocation5], %s48
      %s51 = sshll.u32 [#allocation6], 4
      %s52 = int_to_ptr.vmem [resolvable:$true] %s51
      %54 = dma.hbm_to_vmem [thread:$0]  %s3, 16, %s52, [#allocation5]
    $region17: #{tpu_custom_call.1} parent=1 // pred_fallthru
      _
    // Predicated region
    $region18: #{tpu_custom_call.1} parent=1 // pred_check
      _
    $region19: #{tpu_custom_call.1} parent=1 // pred_check_branch
      %56 = sbr.rel (0) target = $region21
    $region20: #{tpu_custom_call.1} parent=1 // pred_region
      _
    $region21: #{tpu_custom_call.1} parent=1 // pred_fallthru
      _
    // Predicated region
    $region22: #{tpu_custom_call.1} parent=1 // pred_check
      _
    $region23: #{tpu_custom_call.1} parent=1 // pred_check_branch
      %58 = sbr.rel (0) target = $region25
    $region24: #{tpu_custom_call.1} parent=1 // pred_region
      %s60 = ssub.s32 32, 32
      %61 = vsyncadd [#allocation8], %s60
      %s63 = sshll.u32 [#allocation7], 4
      %s64 = int_to_ptr.vmem [resolvable:$true] %s63
      %66 = dma.hbm_to_vmem [thread:$0]  %s5, 32, %s64, [#allocation8]
    $region25: #{tpu_custom_call.1} parent=1 // pred_fallthru
      _
    // Predicated region
    $region26: #{tpu_custom_call.1} parent=1 // pred_check
      _
    $region27: #{tpu_custom_call.1} parent=1 // pred_check_branch
      %68 = sbr.rel (0) target = $region29
    $region28: #{tpu_custom_call.1} parent=1 // pred_region
      %s70 = ssub.s32 2560, 2560
      %71 = vsyncadd [#allocation8], %s70
      %s72 = sshll.u32 [#allocation9], 4
      %s73 = int_to_ptr.vmem [resolvable:$true] %s72
      %78 = dma.hbm_to_vmem [thread:$0]  %s6, 2560, %s73, [#allocation8], 128, 128, 8
    $region29: #{tpu_custom_call.1} parent=1 // pred_fallthru
      _
    // Predicated region
    $region30: #{tpu_custom_call.1} parent=1 // pred_check
      _
    $region31: #{tpu_custom_call.1} parent=1 // pred_check_branch
      %80 = sbr.rel (0) target = $region33
    $region32: #{tpu_custom_call.1} parent=1 // pred_region
      _
    $region33: #{tpu_custom_call.1} parent=1 // pred_fallthru
      _
    // Predicated region
    $region34: #{tpu_custom_call.1} parent=1 // pred_check
      _
    $region35: #{tpu_custom_call.1} parent=1 // pred_check_branch
      %82 = sbr.rel (0) target = $region37
    $region36: #{tpu_custom_call.1} parent=1 // pred_region
      %s84 = ssub.s32 2560, 2560
      %85 = vsyncadd [#allocation11], %s84
      %s86 = sshll.u32 [#allocation10], 4
      %s87 = int_to_ptr.vmem [resolvable:$true] %s86
      %92 = dma.hbm_to_vmem [thread:$0]  %s8, 2560, %s87, [#allocation11], 128, 128, 8
    $region37: #{tpu_custom_call.1} parent=1 // pred_fallthru
      _
    // Predicated region
    $region38: #{tpu_custom_call.1} parent=1 // pred_check
      _
    $region39: #{tpu_custom_call.1} parent=1 // pred_check_branch
      %94 = sbr.rel (0) target = $region41
    $region40: #{tpu_custom_call.1} parent=1 // pred_region
      _
    $region41: #{tpu_custom_call.1} parent=1 // pred_fallthru
      _
    // Predicated region
    $region42: #{tpu_custom_call.1} parent=1 // pred_check
      _
    $region43: #{tpu_custom_call.1} parent=1 // pred_check_branch
      %96 = sbr.rel (0) target = $region45
    $region44: #{tpu_custom_call.1} parent=1 // pred_region
      _
    $region45: #{tpu_custom_call.1} parent=1 // pred_fallthru
      _
    // Predicated region
    $region46: #{tpu_custom_call.1} parent=1 // pred_check
      _
    $region47: #{tpu_custom_call.1} parent=1 // pred_check_branch
      %98 = sbr.rel (0) target = $region49
    $region48: #{tpu_custom_call.1} parent=1 // pred_region
      _
    $region49: #{tpu_custom_call.1} parent=1 // pred_fallthru
      _
    // Predicated region
    $region50: #{tpu_custom_call.1} parent=1 // pred_check
      _
    $region51: #{tpu_custom_call.1} parent=1 // pred_check_branch
      %100 = sbr.rel (0) target = $region53
    $region52: #{tpu_custom_call.1} parent=1 // pred_region
      %101 = dma.done [#allocation3], 256
    $region53: #{tpu_custom_call.1} parent=1 // pred_fallthru
      _
    // Predicated region
    $region54: #{tpu_custom_call.1} parent=1 // pred_check
      _
    $region55: #{tpu_custom_call.1} parent=1 // pred_check_branch
      %103 = sbr.rel (0) target = $region57
    $region56: #{tpu_custom_call.1} parent=1 // pred_region
      %104 = dma.done [#allocation5], 64
    $region57: #{tpu_custom_call.1} parent=1 // pred_fallthru
      _
    // Predicated region
    $region58: #{tpu_custom_call.1} parent=1 // pred_check
      _
    $region59: #{tpu_custom_call.1} parent=1 // pred_check_branch
      %106 = sbr.rel (0) target = $region61
    $region60: #{tpu_custom_call.1} parent=1 // pred_region
      %107 = dma.done [#allocation5], 16
    $region61: #{tpu_custom_call.1} parent=1 // pred_fallthru
      _
    // Predicated region
    $region62: #{tpu_custom_call.1} parent=1 // pred_check
      _
    $region63: #{tpu_custom_call.1} parent=1 // pred_check_branch
      %109 = sbr.rel (0) target = $region65
    $region64: #{tpu_custom_call.1} parent=1 // pred_region
      %110 = dma.done [#allocation8], 32
    $region65: #{tpu_custom_call.1} parent=1 // pred_fallthru
      _
    // Predicated region
    $region66: #{tpu_custom_call.1} parent=1 // pred_check
      _
    $region67: #{tpu_custom_call.1} parent=1 // pred_check_branch
      %112 = sbr.rel (0) target = $region69
    $region68: #{tpu_custom_call.1} parent=1 // pred_region
      %113 = dma.done [#allocation8], 2560
    $region69: #{tpu_custom_call.1} parent=1 // pred_fallthru
      _
    // Predicated region
    $region70: #{tpu_custom_call.1} parent=1 // pred_check
      _
    $region71: #{tpu_custom_call.1} parent=1 // pred_check_branch
      %115 = sbr.rel (0) target = $region73
    $region72: #{tpu_custom_call.1} parent=1 // pred_region
      %116 = dma.done [#allocation11], 2560
    $region73: #{tpu_custom_call.1} parent=1 // pred_fallthru
      _
    %v117 = vld [vmem:[%s0] sm:$0xff]
    %v118 = vld [vmem:[%s0 + $0x8] sm:$0xff]
    %v119 = vld [vmem:[#allocation4] sm:$0x1]
    %121 = vset.pattern.permute.xlu0 0
    %122 = vperm.xlu0 %121, %v117
    %v123 = vpop.permute.xlu0 %122
    %126 = vset.pattern.permute.xlu0 0
    %127 = vperm.xlu0 %126, %v118
    %v128 = vpop.permute.xlu0 %127
    %v130 = vlaneseq
    %v131 = vshrl.u32 %v130, 7
    %v132 = vsub.s32 0, %v131
    %v133 = vrot.slane %v119, %v132
    %v134 = vmul.f32 %v123, %v133
    %v135 = vmul.f32 %v128, %v133
    %v136 = vld [vmem:[#allocation6] sm:$0x1]
    %v138 = vlaneseq
    %v139 = vshrl.u32 %v138, 7
    %v140 = vsub.s32 0, %v139
    %v141 = vrot.slane %v136, %v140
    %v143 = vadd.f32 %v134, %v141
    %v144 = vadd.f32 %v135, %v141
    %v145 = vld [vmem:[#allocation4 + $0x1] sm:$0x1]
    %146 = vset.pattern.permute.xlu0 1
    %147 = vperm.xlu0 %146, %v117
    %v148 = vpop.permute.xlu0 %147
    %150 = vset.pattern.permute.xlu0 1
    %151 = vperm.xlu0 %150, %v118
    %v152 = vpop.permute.xlu0 %151
    %v154 = vlaneseq
    %v155 = vshrl.u32 %v154, 7
    %v156 = vsub.s32 0, %v155
    %v157 = vrot.slane %v145, %v156
    %v158 = vmul.f32 %v148, %v157
    %v159 = vmul.f32 %v152, %v157
    %v160 = vadd.f32 %v143, %v158
    %v161 = vadd.f32 %v144, %v159
    %v162 = vld [vmem:[#allocation4 + $0x2] sm:$0x1]
    %163 = vset.pattern.permute.xlu0 2
    %164 = vperm.xlu0 %163, %v117
    %v165 = vpop.permute.xlu0 %164
    %167 = vset.pattern.permute.xlu0 2
    %168 = vperm.xlu0 %167, %v118
    %v169 = vpop.permute.xlu0 %168
    %v171 = vlaneseq
    %v172 = vshrl.u32 %v171, 7
    %v173 = vsub.s32 0, %v172
    %v174 = vrot.slane %v162, %v173
    %v175 = vmul.f32 %v165, %v174
    %v176 = vmul.f32 %v169, %v174
    %v177 = vadd.f32 %v160, %v175
    %v178 = vadd.f32 %v161, %v176
    %v179 = vld [vmem:[#allocation2] sm:$0xff]
    %v180 = vld [vmem:[#allocation2 + $0x8] sm:$0xff]
    %v181 = vld [vmem:[%s4] sm:$0xff]
    %v182 = vld [vmem:[%s4 + $0x8] sm:$0xff]
    %v183 = vld [vmem:[%s4 + $0x10] sm:$0xff]
    %v184 = vld [vmem:[%s4 + $0x18] sm:$0xff]
    %v185 = vld [vmem:[#allocation7] sm:$0x3]
    %v187 = vlaneseq
    %v188 = vshrl.u32 %v187, 7
    %v189 = vsub.s32 0, %v188
    %v190 = vrot.slane %v185, %v189
    %v191 = vlaneseq
    %v192 = vshrl.u32 %v191, 7
    %v193 = vsub.s32 1, %v192
    %v194 = vrot.slane %v185, %v193
    %vm197 = vcmask 130048
    %v199 = vsel %vm197, %v179, 0
    %v202 = vsel %vm197, %v180, 0
    %204 = vmatprep.subr.mxu0 %v182
    %205 = vmatpush1.msra.mxu0 %v181
    %206 = vmatprep.subr.mxu0 %v184
    %207 = vmatpush1.msra.mxu0 %v183
    %208 = vmatprep.subr.mxu0 0.0
    %209 = vmatpush1.msra.mxu0 0.0
    %210 = vmatprep.subr.mxu0 0.0
    %211 = vmatpush1.msra.mxu0 0.0
    %212 = vmatprep.subr.mxu0 0.0
    %213 = vmatpush1.msra.mxu0 0.0
    %214 = vmatprep.subr.mxu0 0.0
    %215 = vmatpush1.msra.mxu0 0.0
    %216 = vmatprep.subr.mxu0 0.0
    %217 = vmatpush1.msra.mxu0 0.0
    %218 = vmatprep.subr.mxu0 0.0
    %219 = vmatpush1.msra.mxu0 0.0
    %220 = vmatprep.subr.mxu0 0.0
    %221 = vmatpush1.msra.mxu0 0.0
    %222 = vmatprep.subr.mxu0 0.0
    %223 = vmatpush1.msra.mxu0 0.0
    %224 = vmatprep.subr.mxu0 0.0
    %225 = vmatpush1.msra.mxu0 0.0
    %226 = vmatprep.subr.mxu0 0.0
    %227 = vmatpush1.msra.mxu0 0.0
    %228 = vmatprep.subr.mxu0 0.0
    %229 = vmatpush1.msra.mxu0 0.0
    %230 = vmatprep.subr.mxu0 0.0
    %231 = vmatpush1.msra.mxu0 0.0
    %232 = vmatprep.subr.mxu0 0.0
    %233 = vmatpush1.msra.mxu0 0.0
    %234 = vmatprep.subr.mxu0 0.0
    %235 = vmatpush1.msra.mxu0 0.0
    %236 = vmatprep.subr.mxu0 0.0
    %237 = vmatpush1.msra.mxu0 0.0
    %238 = vmatprep.subr.mxu0 0.0
    %239 = vmatpush1.msra.mxu0 0.0
    %240 = vmatprep.subr.mxu0 0.0
    %241 = vmatpush1.msra.mxu0 0.0
    %242 = vmatprep.subr.mxu0 0.0
    %243 = vmatpush1.msra.mxu0 0.0
    %244 = vmatprep.subr.mxu0 0.0
    %245 = vmatpush1.msra.mxu0 0.0
    %246 = vmatprep.subr.mxu0 0.0
    %247 = vmatpush1.msra.mxu0 0.0
    %248 = vmatprep.subr.mxu0 0.0
    %249 = vmatpush1.msra.mxu0 0.0
    %250 = vmatprep.subr.mxu0 0.0
    %251 = vmatpush1.msra.mxu0 0.0
    %252 = vmatprep.subr.mxu0 0.0
    %253 = vmatpush1.msra.mxu0 0.0
    %254 = vmatprep.subr.mxu0 0.0
    %255 = vmatpush1.msra.mxu0 0.0
    %256 = vmatprep.subr.mxu0 0.0
    %257 = vmatpush1.msra.mxu0 0.0
    %258 = vmatprep.subr.mxu0 0.0
    %259 = vmatpush1.msra.mxu0 0.0
    %260 = vmatprep.subr.mxu0 0.0
    %261 = vmatpush1.msra.mxu0 0.0
    %262 = vmatprep.subr.mxu0 0.0
    %263 = vmatpush1.msra.mxu0 0.0
    %264 = vmatprep.subr.mxu0 0.0
    %265 = vmatpush1.msra.mxu0 0.0
    %266 = vmatprep.subr.mxu0 0.0
    %267 = vmatpush1.msra.mxu0 0.0
    %268 = vmatprep.mubr.f32.mxu0 0.0
    %269 = vmatmul.mubr.f32.gmra.mrb[0].mxu0 %v199
    %v270 = vpop.f32.mrb[0].mxu0
    %v271 = vadd.f32 %v190, %v270
    %v272 = vpop.f32.mrb[0].mxu0
    %v273 = vadd.f32 %v194, %v272
    %274 = vmatprep.mubr.f32.mxu0 0.0
    %275 = vmatmul.mubr.f32.gmra.mrb[0].mxu0 %v202
    %v276 = vpop.f32.mrb[0].mxu0
    %v277 = vadd.f32 %v190, %v276
    %v278 = vpop.f32.mrb[0].mxu0
    %v279 = vadd.f32 %v194, %v278
    %280 = vdwg.mxu0
    %v281 = vadd.f32 %v177, %v271
    %v282 = vadd.f32 %v178, %v277
    %v283 = vmax.f32 %v281, 0.0
    %v284 = vmax.f32 %v282, 0.0
    %v285 = vld [vmem:[#allocation9] sm:$0xff]
    %v286 = vld [vmem:[#allocation9 + $0x8] sm:$0xff]
    %v287 = vld [vmem:[#allocation9 + $0x10] sm:$0xff]
    %v288 = vld [vmem:[#allocation9 + $0x18] sm:$0xff]
    %v289 = vld [vmem:[%s7] sm:$0x1]
    %v291 = vlaneseq
    %v292 = vshrl.u32 %v291, 7
    %v293 = vsub.s32 0, %v292
    %v294 = vrot.slane %v289, %v293
    %vm296 = vcmask 261120
    %v298 = vsel %vm296, %v283, 0
    %v301 = vsel %vm296, %v284, 0
    %303 = vmatprep.subr.mxu0 0.0
    %304 = vmatpush1.msra.mxu0 %v285
    %305 = vmatprep.subr.mxu0 0.0
    %306 = vmatpush1.msra.mxu0 %v286
    %307 = vmatprep.subr.mxu0 0.0
    %308 = vmatpush1.msra.mxu0 %v287
    %309 = vmatprep.subr.mxu0 0.0
    %310 = vmatpush1.msra.mxu0 %v288
    %311 = vmatprep.subr.mxu0 0.0
    %312 = vmatpush1.msra.mxu0 0.0
    %313 = vmatprep.subr.mxu0 0.0
    %314 = vmatpush1.msra.mxu0 0.0
    %315 = vmatprep.subr.mxu0 0.0
    %316 = vmatpush1.msra.mxu0 0.0
    %317 = vmatprep.subr.mxu0 0.0
    %318 = vmatpush1.msra.mxu0 0.0
    %319 = vmatprep.subr.mxu0 0.0
    %320 = vmatpush1.msra.mxu0 0.0
    %321 = vmatprep.subr.mxu0 0.0
    %322 = vmatpush1.msra.mxu0 0.0
    %323 = vmatprep.subr.mxu0 0.0
    %324 = vmatpush1.msra.mxu0 0.0
    %325 = vmatprep.subr.mxu0 0.0
    %326 = vmatpush1.msra.mxu0 0.0
    %327 = vmatprep.subr.mxu0 0.0
    %328 = vmatpush1.msra.mxu0 0.0
    %329 = vmatprep.subr.mxu0 0.0
    %330 = vmatpush1.msra.mxu0 0.0
    %331 = vmatprep.subr.mxu0 0.0
    %332 = vmatpush1.msra.mxu0 0.0
    %333 = vmatprep.subr.mxu0 0.0
    %334 = vmatpush1.msra.mxu0 0.0
    %335 = vmatprep.subr.mxu0 0.0
    %336 = vmatpush1.msra.mxu0 0.0
    %337 = vmatprep.subr.mxu0 0.0
    %338 = vmatpush1.msra.mxu0 0.0
    %339 = vmatprep.subr.mxu0 0.0
    %340 = vmatpush1.msra.mxu0 0.0
    %341 = vmatprep.subr.mxu0 0.0
    %342 = vmatpush1.msra.mxu0 0.0
    %343 = vmatprep.subr.mxu0 0.0
    %344 = vmatpush1.msra.mxu0 0.0
    %345 = vmatprep.subr.mxu0 0.0
    %346 = vmatpush1.msra.mxu0 0.0
    %347 = vmatprep.subr.mxu0 0.0
    %348 = vmatpush1.msra.mxu0 0.0
    %349 = vmatprep.subr.mxu0 0.0
    %350 = vmatpush1.msra.mxu0 0.0
    %351 = vmatprep.subr.mxu0 0.0
    %352 = vmatpush1.msra.mxu0 0.0
    %353 = vmatprep.subr.mxu0 0.0
    %354 = vmatpush1.msra.mxu0 0.0
    %355 = vmatprep.subr.mxu0 0.0
    %356 = vmatpush1.msra.mxu0 0.0
    %357 = vmatprep.subr.mxu0 0.0
    %358 = vmatpush1.msra.mxu0 0.0
    %359 = vmatprep.subr.mxu0 0.0
    %360 = vmatpush1.msra.mxu0 0.0
    %361 = vmatprep.subr.mxu0 0.0
    %362 = vmatpush1.msra.mxu0 0.0
    %363 = vmatprep.subr.mxu0 0.0
    %364 = vmatpush1.msra.mxu0 0.0
    %365 = vmatprep.subr.mxu0 0.0
    %366 = vmatpush1.msra.mxu0 0.0
    %367 = vmatprep.mubr.f32.mxu0 0.0
    %368 = vmatmul.mubr.f32.gmra.mrb[0].mxu0 %v298
    %v369 = vpop.f32.mrb[0].mxu0
    %v370 = vadd.f32 %v294, %v369
    %v371 = vpop.f32.mrb[0].mxu0
    %372 = vmatprep.mubr.f32.mxu0 0.0
    %373 = vmatmul.mubr.f32.gmra.mrb[0].mxu0 %v301
    %v374 = vpop.f32.mrb[0].mxu0
    %v375 = vadd.f32 %v294, %v374
    %v376 = vpop.f32.mrb[0].mxu0
    %377 = vdwg.mxu0
    %v378 = vmax.f32 %v370, 0.0
    %v379 = vmax.f32 %v375, 0.0
    %v380 = vld [vmem:[#allocation10] sm:$0xff]
    %v381 = vld [vmem:[#allocation10 + $0x8] sm:$0xff]
    %v382 = vld [vmem:[#allocation10 + $0x10] sm:$0xff]
    %v383 = vld [vmem:[#allocation10 + $0x18] sm:$0xff]
    %v384 = vld [vmem:[%s9] sm:$0x1]
    %v386 = vlaneseq
    %v387 = vshrl.u32 %v386, 7
    %v388 = vsub.s32 0, %v387
    %v389 = vrot.slane %v384, %v388
    %v392 = vsel %vm296, %v378, 0
    %v395 = vsel %vm296, %v379, 0
    %397 = vmatprep.subr.mxu0 0.0
    %398 = vmatpush1.msra.mxu0 %v380
    %399 = vmatprep.subr.mxu0 0.0
    %400 = vmatpush1.msra.mxu0 %v381
    %401 = vmatprep.subr.mxu0 0.0
    %402 = vmatpush1.msra.mxu0 %v382
    %403 = vmatprep.subr.mxu0 0.0
    %404 = vmatpush1.msra.mxu0 %v383
    %405 = vmatprep.subr.mxu0 0.0
    %406 = vmatpush1.msra.mxu0 0.0
    %407 = vmatprep.subr.mxu0 0.0
    %408 = vmatpush1.msra.mxu0 0.0
    %409 = vmatprep.subr.mxu0 0.0
    %410 = vmatpush1.msra.mxu0 0.0
    %411 = vmatprep.subr.mxu0 0.0
    %412 = vmatpush1.msra.mxu0 0.0
    %413 = vmatprep.subr.mxu0 0.0
    %414 = vmatpush1.msra.mxu0 0.0
    %415 = vmatprep.subr.mxu0 0.0
    %416 = vmatpush1.msra.mxu0 0.0
    %417 = vmatprep.subr.mxu0 0.0
    %418 = vmatpush1.msra.mxu0 0.0
    %419 = vmatprep.subr.mxu0 0.0
    %420 = vmatpush1.msra.mxu0 0.0
    %421 = vmatprep.subr.mxu0 0.0
    %422 = vmatpush1.msra.mxu0 0.0
    %423 = vmatprep.subr.mxu0 0.0
    %424 = vmatpush1.msra.mxu0 0.0
    %425 = vmatprep.subr.mxu0 0.0
    %426 = vmatpush1.msra.mxu0 0.0
    %427 = vmatprep.subr.mxu0 0.0
    %428 = vmatpush1.msra.mxu0 0.0
    %429 = vmatprep.subr.mxu0 0.0
    %430 = vmatpush1.msra.mxu0 0.0
    %431 = vmatprep.subr.mxu0 0.0
    %432 = vmatpush1.msra.mxu0 0.0
    %433 = vmatprep.subr.mxu0 0.0
    %434 = vmatpush1.msra.mxu0 0.0
    %435 = vmatprep.subr.mxu0 0.0
    %436 = vmatpush1.msra.mxu0 0.0
    %437 = vmatprep.subr.mxu0 0.0
    %438 = vmatpush1.msra.mxu0 0.0
    %439 = vmatprep.subr.mxu0 0.0
    %440 = vmatpush1.msra.mxu0 0.0
    %441 = vmatprep.subr.mxu0 0.0
    %442 = vmatpush1.msra.mxu0 0.0
    %443 = vmatprep.subr.mxu0 0.0
    %444 = vmatpush1.msra.mxu0 0.0
    %445 = vmatprep.subr.mxu0 0.0
    %446 = vmatpush1.msra.mxu0 0.0
    %447 = vmatprep.subr.mxu0 0.0
    %448 = vmatpush1.msra.mxu0 0.0
    %449 = vmatprep.subr.mxu0 0.0
    %450 = vmatpush1.msra.mxu0 0.0
    %451 = vmatprep.subr.mxu0 0.0
    %452 = vmatpush1.msra.mxu0 0.0
    %453 = vmatprep.subr.mxu0 0.0
    %454 = vmatpush1.msra.mxu0 0.0
    %455 = vmatprep.subr.mxu0 0.0
    %456 = vmatpush1.msra.mxu0 0.0
    %457 = vmatprep.subr.mxu0 0.0
    %458 = vmatpush1.msra.mxu0 0.0
    %459 = vmatprep.subr.mxu0 0.0
    %460 = vmatpush1.msra.mxu0 0.0
    %461 = vmatprep.mubr.f32.mxu0 0.0
    %462 = vmatmul.mubr.f32.gmra.mrb[0].mxu0 %v392
    %v463 = vpop.f32.mrb[0].mxu0
    %v464 = vadd.f32 %v389, %v463
    %v465 = vpop.f32.mrb[0].mxu0
    %466 = vmatprep.mubr.f32.mxu0 0.0
    %467 = vmatmul.mubr.f32.gmra.mrb[0].mxu0 %v395
    %v468 = vpop.f32.mrb[0].mxu0
    %v469 = vadd.f32 %v389, %v468
    %v470 = vpop.f32.mrb[0].mxu0
    %471 = vdwg.mxu0
    %v472 = vadd.f32 %v281, %v464
    %v473 = vadd.f32 %v282, %v469
    %476 = vrot.lane.b32.xlu0 %v271, 96
    %v477 = vpop.permute.xlu0 %476
    %478 = vrot.lane.b32.xlu0 %v277, 96
    %v479 = vpop.permute.xlu0 %478
    %v482 = vadd.f32 %v472, %v477
    %v483 = vadd.f32 %v473, %v479
    %v484 = vmax.f32 %v482, 0.0
    %v485 = vmax.f32 %v483, 0.0
    %s486 = scalar_lea.vmem [#allocation9], 32
    %v487 = vld [vmem:[%s486] sm:$0xff]
    %v488 = vld [vmem:[%s486 + $0x8] sm:$0xff]
    %v489 = vld [vmem:[%s486 + $0x10] sm:$0xff]
    %v490 = vld [vmem:[%s486 + $0x18] sm:$0xff]
    %s491 = scalar_lea.vmem %s7, 1
    %v492 = vld [vmem:[%s491] sm:$0x1]
    %v494 = vlaneseq
    %v495 = vshrl.u32 %v494, 7
    %v496 = vsub.s32 0, %v495
    %v497 = vrot.slane %v492, %v496
    %v500 = vsel %vm296, %v484, 0
    %v503 = vsel %vm296, %v485, 0
    %505 = vmatprep.subr.mxu0 0.0
    %506 = vmatpush1.msra.mxu0 %v487
    %507 = vmatprep.subr.mxu0 0.0
    %508 = vmatpush1.msra.mxu0 %v488
    %509 = vmatprep.subr.mxu0 0.0
    %510 = vmatpush1.msra.mxu0 %v489
    %511 = vmatprep.subr.mxu0 0.0
    %512 = vmatpush1.msra.mxu0 %v490
    %513 = vmatprep.subr.mxu0 0.0
    %514 = vmatpush1.msra.mxu0 0.0
    %515 = vmatprep.subr.mxu0 0.0
    %516 = vmatpush1.msra.mxu0 0.0
    %517 = vmatprep.subr.mxu0 0.0
    %518 = vmatpush1.msra.mxu0 0.0
    %519 = vmatprep.subr.mxu0 0.0
    %520 = vmatpush1.msra.mxu0 0.0
    %521 = vmatprep.subr.mxu0 0.0
    %522 = vmatpush1.msra.mxu0 0.0
    %523 = vmatprep.subr.mxu0 0.0
    %524 = vmatpush1.msra.mxu0 0.0
    %525 = vmatprep.subr.mxu0 0.0
    %526 = vmatpush1.msra.mxu0 0.0
    %527 = vmatprep.subr.mxu0 0.0
    %528 = vmatpush1.msra.mxu0 0.0
    %529 = vmatprep.subr.mxu0 0.0
    %530 = vmatpush1.msra.mxu0 0.0
    %531 = vmatprep.subr.mxu0 0.0
    %532 = vmatpush1.msra.mxu0 0.0
    %533 = vmatprep.subr.mxu0 0.0
    %534 = vmatpush1.msra.mxu0 0.0
    %535 = vmatprep.subr.mxu0 0.0
    %536 = vmatpush1.msra.mxu0 0.0
    %537 = vmatprep.subr.mxu0 0.0
    %538 = vmatpush1.msra.mxu0 0.0
    %539 = vmatprep.subr.mxu0 0.0
    %540 = vmatpush1.msra.mxu0 0.0
    %541 = vmatprep.subr.mxu0 0.0
    %542 = vmatpush1.msra.mxu0 0.0
    %543 = vmatprep.subr.mxu0 0.0
    %544 = vmatpush1.msra.mxu0 0.0
    %545 = vmatprep.subr.mxu0 0.0
    %546 = vmatpush1.msra.mxu0 0.0
    %547 = vmatprep.subr.mxu0 0.0
    %548 = vmatpush1.msra.mxu0 0.0
    %549 = vmatprep.subr.mxu0 0.0
    %550 = vmatpush1.msra.mxu0 0.0
    %551 = vmatprep.subr.mxu0 0.0
    %552 = vmatpush1.msra.mxu0 0.0
    %553 = vmatprep.subr.mxu0 0.0
    %554 = vmatpush1.msra.mxu0 0.0
    %555 = vmatprep.subr.mxu0 0.0
    %556 = vmatpush1.msra.mxu0 0.0
    %557 = vmatprep.subr.mxu0 0.0
    %558 = vmatpush1.msra.mxu0 0.0
    %559 = vmatprep.subr.mxu0 0.0
    %560 = vmatpush1.msra.mxu0 0.0
    %561 = vmatprep.subr.mxu0 0.0
    %562 = vmatpush1.msra.mxu0 0.0
    %563 = vmatprep.subr.mxu0 0.0
    %564 = vmatpush1.msra.mxu0 0.0
    %565 = vmatprep.subr.mxu0 0.0
    %566 = vmatpush1.msra.mxu0 0.0
    %567 = vmatprep.subr.mxu0 0.0
    %568 = vmatpush1.msra.mxu0 0.0
    %569 = vmatprep.mubr.f32.mxu0 0.0
    %570 = vmatmul.mubr.f32.gmra.mrb[0].mxu0 %v500
    %v571 = vpop.f32.mrb[0].mxu0
    %v572 = vadd.f32 %v497, %v571
    %v573 = vpop.f32.mrb[0].mxu0
    %574 = vmatprep.mubr.f32.mxu0 0.0
    %575 = vmatmul.mubr.f32.gmra.mrb[0].mxu0 %v503
    %v576 = vpop.f32.mrb[0].mxu0
    %v577 = vadd.f32 %v497, %v576
    %v578 = vpop.f32.mrb[0].mxu0
    %579 = vdwg.mxu0
    %v580 = vmax.f32 %v572, 0.0
    %v581 = vmax.f32 %v577, 0.0
    %s582 = scalar_lea.vmem [#allocation10], 32
    %v583 = vld [vmem:[%s582] sm:$0xff]
    %v584 = vld [vmem:[%s582 + $0x8] sm:$0xff]
    %v585 = vld [vmem:[%s582 + $0x10] sm:$0xff]
    %v586 = vld [vmem:[%s582 + $0x18] sm:$0xff]
    %s587 = scalar_lea.vmem %s9, 1
    %v588 = vld [vmem:[%s587] sm:$0x1]
    %v590 = vlaneseq
    %v591 = vshrl.u32 %v590, 7
    %v592 = vsub.s32 0, %v591
    %v593 = vrot.slane %v588, %v592
    %v596 = vsel %vm296, %v580, 0
    %v599 = vsel %vm296, %v581, 0
    %601 = vmatprep.subr.mxu0 0.0
    %602 = vmatpush1.msra.mxu0 %v583
    %603 = vmatprep.subr.mxu0 0.0
    %604 = vmatpush1.msra.mxu0 %v584
    %605 = vmatprep.subr.mxu0 0.0
    %606 = vmatpush1.msra.mxu0 %v585
    %607 = vmatprep.subr.mxu0 0.0
    %608 = vmatpush1.msra.mxu0 %v586
    %609 = vmatprep.subr.mxu0 0.0
    %610 = vmatpush1.msra.mxu0 0.0
    %611 = vmatprep.subr.mxu0 0.0
    %612 = vmatpush1.msra.mxu0 0.0
    %613 = vmatprep.subr.mxu0 0.0
    %614 = vmatpush1.msra.mxu0 0.0
    %615 = vmatprep.subr.mxu0 0.0
    %616 = vmatpush1.msra.mxu0 0.0
    %617 = vmatprep.subr.mxu0 0.0
    %618 = vmatpush1.msra.mxu0 0.0
    %619 = vmatprep.subr.mxu0 0.0
    %620 = vmatpush1.msra.mxu0 0.0
    %621 = vmatprep.subr.mxu0 0.0
    %622 = vmatpush1.msra.mxu0 0.0
    %623 = vmatprep.subr.mxu0 0.0
    %624 = vmatpush1.msra.mxu0 0.0
    %625 = vmatprep.subr.mxu0 0.0
    %626 = vmatpush1.msra.mxu0 0.0
    %627 = vmatprep.subr.mxu0 0.0
    %628 = vmatpush1.msra.mxu0 0.0
    %629 = vmatprep.subr.mxu0 0.0
    %630 = vmatpush1.msra.mxu0 0.0
    %631 = vmatprep.subr.mxu0 0.0
    %632 = vmatpush1.msra.mxu0 0.0
    %633 = vmatprep.subr.mxu0 0.0
    %634 = vmatpush1.msra.mxu0 0.0
    %635 = vmatprep.subr.mxu0 0.0
    %636 = vmatpush1.msra.mxu0 0.0
    %637 = vmatprep.subr.mxu0 0.0
    %638 = vmatpush1.msra.mxu0 0.0
    %639 = vmatprep.subr.mxu0 0.0
    %640 = vmatpush1.msra.mxu0 0.0
    %641 = vmatprep.subr.mxu0 0.0
    %642 = vmatpush1.msra.mxu0 0.0
    %643 = vmatprep.subr.mxu0 0.0
    %644 = vmatpush1.msra.mxu0 0.0
    %645 = vmatprep.subr.mxu0 0.0
    %646 = vmatpush1.msra.mxu0 0.0
    %647 = vmatprep.subr.mxu0 0.0
    %648 = vmatpush1.msra.mxu0 0.0
    %649 = vmatprep.subr.mxu0 0.0
    %650 = vmatpush1.msra.mxu0 0.0
    %651 = vmatprep.subr.mxu0 0.0
    %652 = vmatpush1.msra.mxu0 0.0
    %653 = vmatprep.subr.mxu0 0.0
    %654 = vmatpush1.msra.mxu0 0.0
    %655 = vmatprep.subr.mxu0 0.0
    %656 = vmatpush1.msra.mxu0 0.0
    %657 = vmatprep.subr.mxu0 0.0
    %658 = vmatpush1.msra.mxu0 0.0
    %659 = vmatprep.subr.mxu0 0.0
    %660 = vmatpush1.msra.mxu0 0.0
    %661 = vmatprep.subr.mxu0 0.0
    %662 = vmatpush1.msra.mxu0 0.0
    %663 = vmatprep.subr.mxu0 0.0
    %664 = vmatpush1.msra.mxu0 0.0
    %665 = vmatprep.mubr.f32.mxu0 0.0
    %666 = vmatmul.mubr.f32.gmra.mrb[0].mxu0 %v596
    %v667 = vpop.f32.mrb[0].mxu0
    %v668 = vadd.f32 %v593, %v667
    %v669 = vpop.f32.mrb[0].mxu0
    %670 = vmatprep.mubr.f32.mxu0 0.0
    %671 = vmatmul.mubr.f32.gmra.mrb[0].mxu0 %v599
    %v672 = vpop.f32.mrb[0].mxu0
    %v673 = vadd.f32 %v593, %v672
    %v674 = vpop.f32.mrb[0].mxu0
    %675 = vdwg.mxu0
    %v676 = vadd.f32 %v482, %v668
    %v677 = vadd.f32 %v483, %v673
    %678 = vrot.lane.b32.xlu0 %v271, 64
    %v679 = vpop.permute.xlu0 %678
    %680 = vrot.lane.b32.xlu0 %v277, 64
    %v681 = vpop.permute.xlu0 %680
    %v684 = vadd.f32 %v676, %v679
    %v685 = vadd.f32 %v677, %v681
    %v686 = vmax.f32 %v684, 0.0
    %v687 = vmax.f32 %v685, 0.0
    %s688 = scalar_lea.vmem [#allocation9], 64
    %v689 = vld [vmem:[%s688] sm:$0xff]
    %v690 = vld [vmem:[%s688 + $0x8] sm:$0xff]
    %v691 = vld [vmem:[%s688 + $0x10] sm:$0xff]
    %v692 = vld [vmem:[%s688 + $0x18] sm:$0xff]
    %s693 = scalar_lea.vmem %s7, 2
    %v694 = vld [vmem:[%s693] sm:$0x1]
    %v696 = vlaneseq
    %v697 = vshrl.u32 %v696, 7
    %v698 = vsub.s32 0, %v697
    %v699 = vrot.slane %v694, %v698
    %v702 = vsel %vm296, %v686, 0
    %v705 = vsel %vm296, %v687, 0
    %707 = vmatprep.subr.mxu0 0.0
    %708 = vmatpush1.msra.mxu0 %v689
    %709 = vmatprep.subr.mxu0 0.0
    %710 = vmatpush1.msra.mxu0 %v690
    %711 = vmatprep.subr.mxu0 0.0
    %712 = vmatpush1.msra.mxu0 %v691
    %713 = vmatprep.subr.mxu0 0.0
    %714 = vmatpush1.msra.mxu0 %v692
    %715 = vmatprep.subr.mxu0 0.0
    %716 = vmatpush1.msra.mxu0 0.0
    %717 = vmatprep.subr.mxu0 0.0
    %718 = vmatpush1.msra.mxu0 0.0
    %719 = vmatprep.subr.mxu0 0.0
    %720 = vmatpush1.msra.mxu0 0.0
    %721 = vmatprep.subr.mxu0 0.0
    %722 = vmatpush1.msra.mxu0 0.0
    %723 = vmatprep.subr.mxu0 0.0
    %724 = vmatpush1.msra.mxu0 0.0
    %725 = vmatprep.subr.mxu0 0.0
    %726 = vmatpush1.msra.mxu0 0.0
    %727 = vmatprep.subr.mxu0 0.0
    %728 = vmatpush1.msra.mxu0 0.0
    %729 = vmatprep.subr.mxu0 0.0
    %730 = vmatpush1.msra.mxu0 0.0
    %731 = vmatprep.subr.mxu0 0.0
    %732 = vmatpush1.msra.mxu0 0.0
    %733 = vmatprep.subr.mxu0 0.0
    %734 = vmatpush1.msra.mxu0 0.0
    %735 = vmatprep.subr.mxu0 0.0
    %736 = vmatpush1.msra.mxu0 0.0
    %737 = vmatprep.subr.mxu0 0.0
    %738 = vmatpush1.msra.mxu0 0.0
    %739 = vmatprep.subr.mxu0 0.0
    %740 = vmatpush1.msra.mxu0 0.0
    %741 = vmatprep.subr.mxu0 0.0
    %742 = vmatpush1.msra.mxu0 0.0
    %743 = vmatprep.subr.mxu0 0.0
    %744 = vmatpush1.msra.mxu0 0.0
    %745 = vmatprep.subr.mxu0 0.0
    %746 = vmatpush1.msra.mxu0 0.0
    %747 = vmatprep.subr.mxu0 0.0
    %748 = vmatpush1.msra.mxu0 0.0
    %749 = vmatprep.subr.mxu0 0.0
    %750 = vmatpush1.msra.mxu0 0.0
    %751 = vmatprep.subr.mxu0 0.0
    %752 = vmatpush1.msra.mxu0 0.0
    %753 = vmatprep.subr.mxu0 0.0
    %754 = vmatpush1.msra.mxu0 0.0
    %755 = vmatprep.subr.mxu0 0.0
    %756 = vmatpush1.msra.mxu0 0.0
    %757 = vmatprep.subr.mxu0 0.0
    %758 = vmatpush1.msra.mxu0 0.0
    %759 = vmatprep.subr.mxu0 0.0
    %760 = vmatpush1.msra.mxu0 0.0
    %761 = vmatprep.subr.mxu0 0.0
    %762 = vmatpush1.msra.mxu0 0.0
    %763 = vmatprep.subr.mxu0 0.0
    %764 = vmatpush1.msra.mxu0 0.0
    %765 = vmatprep.subr.mxu0 0.0
    %766 = vmatpush1.msra.mxu0 0.0
    %767 = vmatprep.subr.mxu0 0.0
    %768 = vmatpush1.msra.mxu0 0.0
    %769 = vmatprep.subr.mxu0 0.0
    %770 = vmatpush1.msra.mxu0 0.0
    %771 = vmatprep.mubr.f32.mxu0 0.0
    %772 = vmatmul.mubr.f32.gmra.mrb[0].mxu0 %v702
    %v773 = vpop.f32.mrb[0].mxu0
    %v774 = vadd.f32 %v699, %v773
    %v775 = vpop.f32.mrb[0].mxu0
    %776 = vmatprep.mubr.f32.mxu0 0.0
    %777 = vmatmul.mubr.f32.gmra.mrb[0].mxu0 %v705
    %v778 = vpop.f32.mrb[0].mxu0
    %v779 = vadd.f32 %v699, %v778
    %v780 = vpop.f32.mrb[0].mxu0
    %781 = vdwg.mxu0
    %v782 = vmax.f32 %v774, 0.0
    %v783 = vmax.f32 %v779, 0.0
    %s784 = scalar_lea.vmem [#allocation10], 64
    %v785 = vld [vmem:[%s784] sm:$0xff]
    %v786 = vld [vmem:[%s784 + $0x8] sm:$0xff]
    %v787 = vld [vmem:[%s784 + $0x10] sm:$0xff]
    %v788 = vld [vmem:[%s784 + $0x18] sm:$0xff]
    %s789 = scalar_lea.vmem %s9, 2
    %v790 = vld [vmem:[%s789] sm:$0x1]
    %v792 = vlaneseq
    %v793 = vshrl.u32 %v792, 7
    %v794 = vsub.s32 0, %v793
    %v795 = vrot.slane %v790, %v794
    %v798 = vsel %vm296, %v782, 0
    %v801 = vsel %vm296, %v783, 0
    %803 = vmatprep.subr.mxu0 0.0
    %804 = vmatpush1.msra.mxu0 %v785
    %805 = vmatprep.subr.mxu0 0.0
    %806 = vmatpush1.msra.mxu0 %v786
    %807 = vmatprep.subr.mxu0 0.0
    %808 = vmatpush1.msra.mxu0 %v787
    %809 = vmatprep.subr.mxu0 0.0
    %810 = vmatpush1.msra.mxu0 %v788
    %811 = vmatprep.subr.mxu0 0.0
    %812 = vmatpush1.msra.mxu0 0.0
    %813 = vmatprep.subr.mxu0 0.0
    %814 = vmatpush1.msra.mxu0 0.0
    %815 = vmatprep.subr.mxu0 0.0
    %816 = vmatpush1.msra.mxu0 0.0
    %817 = vmatprep.subr.mxu0 0.0
    %818 = vmatpush1.msra.mxu0 0.0
    %819 = vmatprep.subr.mxu0 0.0
    %820 = vmatpush1.msra.mxu0 0.0
    %821 = vmatprep.subr.mxu0 0.0
    %822 = vmatpush1.msra.mxu0 0.0
    %823 = vmatprep.subr.mxu0 0.0
    %824 = vmatpush1.msra.mxu0 0.0
    %825 = vmatprep.subr.mxu0 0.0
    %826 = vmatpush1.msra.mxu0 0.0
    %827 = vmatprep.subr.mxu0 0.0
    %828 = vmatpush1.msra.mxu0 0.0
    %829 = vmatprep.subr.mxu0 0.0
    %830 = vmatpush1.msra.mxu0 0.0
    %831 = vmatprep.subr.mxu0 0.0
    %832 = vmatpush1.msra.mxu0 0.0
    %833 = vmatprep.subr.mxu0 0.0
    %834 = vmatpush1.msra.mxu0 0.0
    %835 = vmatprep.subr.mxu0 0.0
    %836 = vmatpush1.msra.mxu0 0.0
    %837 = vmatprep.subr.mxu0 0.0
    %838 = vmatpush1.msra.mxu0 0.0
    %839 = vmatprep.subr.mxu0 0.0
    %840 = vmatpush1.msra.mxu0 0.0
    %841 = vmatprep.subr.mxu0 0.0
    %842 = vmatpush1.msra.mxu0 0.0
    %843 = vmatprep.subr.mxu0 0.0
    %844 = vmatpush1.msra.mxu0 0.0
    %845 = vmatprep.subr.mxu0 0.0
    %846 = vmatpush1.msra.mxu0 0.0
    %847 = vmatprep.subr.mxu0 0.0
    %848 = vmatpush1.msra.mxu0 0.0
    %849 = vmatprep.subr.mxu0 0.0
    %850 = vmatpush1.msra.mxu0 0.0
    %851 = vmatprep.subr.mxu0 0.0
    %852 = vmatpush1.msra.mxu0 0.0
    %853 = vmatprep.subr.mxu0 0.0
    %854 = vmatpush1.msra.mxu0 0.0
    %855 = vmatprep.subr.mxu0 0.0
    %856 = vmatpush1.msra.mxu0 0.0
    %857 = vmatprep.subr.mxu0 0.0
    %858 = vmatpush1.msra.mxu0 0.0
    %859 = vmatprep.subr.mxu0 0.0
    %860 = vmatpush1.msra.mxu0 0.0
    %861 = vmatprep.subr.mxu0 0.0
    %862 = vmatpush1.msra.mxu0 0.0
    %863 = vmatprep.subr.mxu0 0.0
    %864 = vmatpush1.msra.mxu0 0.0
    %865 = vmatprep.subr.mxu0 0.0
    %866 = vmatpush1.msra.mxu0 0.0
    %867 = vmatprep.mubr.f32.mxu0 0.0
    %868 = vmatmul.mubr.f32.gmra.mrb[0].mxu0 %v798
    %v869 = vpop.f32.mrb[0].mxu0
    %v870 = vadd.f32 %v795, %v869
    %v871 = vpop.f32.mrb[0].mxu0
    %872 = vmatprep.mubr.f32.mxu0 0.0
    %873 = vmatmul.mubr.f32.gmra.mrb[0].mxu0 %v801
    %v874 = vpop.f32.mrb[0].mxu0
    %v875 = vadd.f32 %v795, %v874
    %v876 = vpop.f32.mrb[0].mxu0
    %877 = vdwg.mxu0
    %v878 = vadd.f32 %v684, %v870
    %v879 = vadd.f32 %v685, %v875
    %880 = vrot.lane.b32.xlu0 %v271, 32
    %v881 = vpop.permute.xlu0 %880
    %882 = vrot.lane.b32.xlu0 %v277, 32
    %v883 = vpop.permute.xlu0 %882
    %v886 = vadd.f32 %v878, %v881
    %v887 = vadd.f32 %v879, %v883
    %v888 = vmax.f32 %v886, 0.0
    %v889 = vmax.f32 %v887, 0.0
    %s890 = scalar_lea.vmem [#allocation9], 96
    %v891 = vld [vmem:[%s890] sm:$0xff]
    %v892 = vld [vmem:[%s890 + $0x8] sm:$0xff]
    %v893 = vld [vmem:[%s890 + $0x10] sm:$0xff]
    %v894 = vld [vmem:[%s890 + $0x18] sm:$0xff]
    %s895 = scalar_lea.vmem %s7, 3
    %v896 = vld [vmem:[%s895] sm:$0x1]
    %v898 = vlaneseq
    %v899 = vshrl.u32 %v898, 7
    %v900 = vsub.s32 0, %v899
    %v901 = vrot.slane %v896, %v900
    %v904 = vsel %vm296, %v888, 0
    %v907 = vsel %vm296, %v889, 0
    %909 = vmatprep.subr.mxu0 0.0
    %910 = vmatpush1.msra.mxu0 %v891
    %911 = vmatprep.subr.mxu0 0.0
    %912 = vmatpush1.msra.mxu0 %v892
    %913 = vmatprep.subr.mxu0 0.0
    %914 = vmatpush1.msra.mxu0 %v893
    %915 = vmatprep.subr.mxu0 0.0
    %916 = vmatpush1.msra.mxu0 %v894
    %917 = vmatprep.subr.mxu0 0.0
    %918 = vmatpush1.msra.mxu0 0.0
    %919 = vmatprep.subr.mxu0 0.0
    %920 = vmatpush1.msra.mxu0 0.0
    %921 = vmatprep.subr.mxu0 0.0
    %922 = vmatpush1.msra.mxu0 0.0
    %923 = vmatprep.subr.mxu0 0.0
    %924 = vmatpush1.msra.mxu0 0.0
    %925 = vmatprep.subr.mxu0 0.0
    %926 = vmatpush1.msra.mxu0 0.0
    %927 = vmatprep.subr.mxu0 0.0
    %928 = vmatpush1.msra.mxu0 0.0
    %929 = vmatprep.subr.mxu0 0.0
    %930 = vmatpush1.msra.mxu0 0.0
    %931 = vmatprep.subr.mxu0 0.0
    %932 = vmatpush1.msra.mxu0 0.0
    %933 = vmatprep.subr.mxu0 0.0
    %934 = vmatpush1.msra.mxu0 0.0
    %935 = vmatprep.subr.mxu0 0.0
    %936 = vmatpush1.msra.mxu0 0.0
    %937 = vmatprep.subr.mxu0 0.0
    %938 = vmatpush1.msra.mxu0 0.0
    %939 = vmatprep.subr.mxu0 0.0
    %940 = vmatpush1.msra.mxu0 0.0
    %941 = vmatprep.subr.mxu0 0.0
    %942 = vmatpush1.msra.mxu0 0.0
    %943 = vmatprep.subr.mxu0 0.0
    %944 = vmatpush1.msra.mxu0 0.0
    %945 = vmatprep.subr.mxu0 0.0
    %946 = vmatpush1.msra.mxu0 0.0
    %947 = vmatprep.subr.mxu0 0.0
    %948 = vmatpush1.msra.mxu0 0.0
    %949 = vmatprep.subr.mxu0 0.0
    %950 = vmatpush1.msra.mxu0 0.0
    %951 = vmatprep.subr.mxu0 0.0
    %952 = vmatpush1.msra.mxu0 0.0
    %953 = vmatprep.subr.mxu0 0.0
    %954 = vmatpush1.msra.mxu0 0.0
    %955 = vmatprep.subr.mxu0 0.0
    %956 = vmatpush1.msra.mxu0 0.0
    %957 = vmatprep.subr.mxu0 0.0
    %958 = vmatpush1.msra.mxu0 0.0
    %959 = vmatprep.subr.mxu0 0.0
    %960 = vmatpush1.msra.mxu0 0.0
    %961 = vmatprep.subr.mxu0 0.0
    %962 = vmatpush1.msra.mxu0 0.0
    %963 = vmatprep.subr.mxu0 0.0
    %964 = vmatpush1.msra.mxu0 0.0
    %965 = vmatprep.subr.mxu0 0.0
    %966 = vmatpush1.msra.mxu0 0.0
    %967 = vmatprep.subr.mxu0 0.0
    %968 = vmatpush1.msra.mxu0 0.0
    %969 = vmatprep.subr.mxu0 0.0
    %970 = vmatpush1.msra.mxu0 0.0
    %971 = vmatprep.subr.mxu0 0.0
    %972 = vmatpush1.msra.mxu0 0.0
    %973 = vmatprep.mubr.f32.mxu0 0.0
    %974 = vmatmul.mubr.f32.gmra.mrb[0].mxu0 %v904
    %v975 = vpop.f32.mrb[0].mxu0
    %v976 = vadd.f32 %v901, %v975
    %v977 = vpop.f32.mrb[0].mxu0
    %978 = vmatprep.mubr.f32.mxu0 0.0
    %979 = vmatmul.mubr.f32.gmra.mrb[0].mxu0 %v907
    %v980 = vpop.f32.mrb[0].mxu0
    %v981 = vadd.f32 %v901, %v980
    %v982 = vpop.f32.mrb[0].mxu0
    %983 = vdwg.mxu0
    %v984 = vmax.f32 %v976, 0.0
    %v985 = vmax.f32 %v981, 0.0
    %s986 = scalar_lea.vmem [#allocation10], 96
    %v987 = vld [vmem:[%s986] sm:$0xff]
    %v988 = vld [vmem:[%s986 + $0x8] sm:$0xff]
    %v989 = vld [vmem:[%s986 + $0x10] sm:$0xff]
    %v990 = vld [vmem:[%s986 + $0x18] sm:$0xff]
    %s991 = scalar_lea.vmem %s9, 3
    %v992 = vld [vmem:[%s991] sm:$0x1]
    %v994 = vlaneseq
    %v995 = vshrl.u32 %v994, 7
    %v996 = vsub.s32 0, %v995
    %v997 = vrot.slane %v992, %v996
    %v1000 = vsel %vm296, %v984, 0
    %v1003 = vsel %vm296, %v985, 0
    %1005 = vmatprep.subr.mxu0 0.0
    %1006 = vmatpush1.msra.mxu0 %v987
    %1007 = vmatprep.subr.mxu0 0.0
    %1008 = vmatpush1.msra.mxu0 %v988
    %1009 = vmatprep.subr.mxu0 0.0
    %1010 = vmatpush1.msra.mxu0 %v989
    %1011 = vmatprep.subr.mxu0 0.0
    %1012 = vmatpush1.msra.mxu0 %v990
    %1013 = vmatprep.subr.mxu0 0.0
    %1014 = vmatpush1.msra.mxu0 0.0
    %1015 = vmatprep.subr.mxu0 0.0
    %1016 = vmatpush1.msra.mxu0 0.0
    %1017 = vmatprep.subr.mxu0 0.0
    %1018 = vmatpush1.msra.mxu0 0.0
    %1019 = vmatprep.subr.mxu0 0.0
    %1020 = vmatpush1.msra.mxu0 0.0
    %1021 = vmatprep.subr.mxu0 0.0
    %1022 = vmatpush1.msra.mxu0 0.0
    %1023 = vmatprep.subr.mxu0 0.0
    %1024 = vmatpush1.msra.mxu0 0.0
    %1025 = vmatprep.subr.mxu0 0.0
    %1026 = vmatpush1.msra.mxu0 0.0
    %1027 = vmatprep.subr.mxu0 0.0
    %1028 = vmatpush1.msra.mxu0 0.0
    %1029 = vmatprep.subr.mxu0 0.0
    %1030 = vmatpush1.msra.mxu0 0.0
    %1031 = vmatprep.subr.mxu0 0.0
    %1032 = vmatpush1.msra.mxu0 0.0
    %1033 = vmatprep.subr.mxu0 0.0
    %1034 = vmatpush1.msra.mxu0 0.0
    %1035 = vmatprep.subr.mxu0 0.0
    %1036 = vmatpush1.msra.mxu0 0.0
    %1037 = vmatprep.subr.mxu0 0.0
    %1038 = vmatpush1.msra.mxu0 0.0
    %1039 = vmatprep.subr.mxu0 0.0
    %1040 = vmatpush1.msra.mxu0 0.0
    %1041 = vmatprep.subr.mxu0 0.0
    %1042 = vmatpush1.msra.mxu0 0.0
    %1043 = vmatprep.subr.mxu0 0.0
    %1044 = vmatpush1.msra.mxu0 0.0
    %1045 = vmatprep.subr.mxu0 0.0
    %1046 = vmatpush1.msra.mxu0 0.0
    %1047 = vmatprep.subr.mxu0 0.0
    %1048 = vmatpush1.msra.mxu0 0.0
    %1049 = vmatprep.subr.mxu0 0.0
    %1050 = vmatpush1.msra.mxu0 0.0
    %1051 = vmatprep.subr.mxu0 0.0
    %1052 = vmatpush1.msra.mxu0 0.0
    %1053 = vmatprep.subr.mxu0 0.0
    %1054 = vmatpush1.msra.mxu0 0.0
    %1055 = vmatprep.subr.mxu0 0.0
    %1056 = vmatpush1.msra.mxu0 0.0
    %1057 = vmatprep.subr.mxu0 0.0
    %1058 = vmatpush1.msra.mxu0 0.0
    %1059 = vmatprep.subr.mxu0 0.0
    %1060 = vmatpush1.msra.mxu0 0.0
    %1061 = vmatprep.subr.mxu0 0.0
    %1062 = vmatpush1.msra.mxu0 0.0
    %1063 = vmatprep.subr.mxu0 0.0
    %1064 = vmatpush1.msra.mxu0 0.0
    %1065 = vmatprep.subr.mxu0 0.0
    %1066 = vmatpush1.msra.mxu0 0.0
    %1067 = vmatprep.subr.mxu0 0.0
    %1068 = vmatpush1.msra.mxu0 0.0
    %1069 = vmatprep.mubr.f32.mxu0 0.0
    %1070 = vmatmul.mubr.f32.gmra.mrb[0].mxu0 %v1000
    %v1071 = vpop.f32.mrb[0].mxu0
    %v1072 = vadd.f32 %v997, %v1071
    %v1073 = vpop.f32.mrb[0].mxu0
    %1074 = vmatprep.mubr.f32.mxu0 0.0
    %1075 = vmatmul.mubr.f32.gmra.mrb[0].mxu0 %v1003
    %v1076 = vpop.f32.mrb[0].mxu0
    %v1077 = vadd.f32 %v997, %v1076
    %v1078 = vpop.f32.mrb[0].mxu0
    %1079 = vdwg.mxu0
    %v1080 = vadd.f32 %v886, %v1072
    %v1081 = vadd.f32 %v887, %v1077
    %v1082 = vadd.f32 %v1080, %v273
    %v1083 = vadd.f32 %v1081, %v279
    %v1084 = vmax.f32 %v1082, 0.0
    %v1085 = vmax.f32 %v1083, 0.0
    %s1086 = scalar_lea.vmem [#allocation9], 128
    %v1087 = vld [vmem:[%s1086] sm:$0xff]
    %v1088 = vld [vmem:[%s1086 + $0x8] sm:$0xff]
    %v1089 = vld [vmem:[%s1086 + $0x10] sm:$0xff]
    %v1090 = vld [vmem:[%s1086 + $0x18] sm:$0xff]
    %s1091 = scalar_lea.vmem %s7, 4
    %v1092 = vld [vmem:[%s1091] sm:$0x1]
    %v1094 = vlaneseq
    %v1095 = vshrl.u32 %v1094, 7
    %v1096 = vsub.s32 0, %v1095
    %v1097 = vrot.slane %v1092, %v1096
    %v1100 = vsel %vm296, %v1084, 0
    %v1103 = vsel %vm296, %v1085, 0
    %1105 = vmatprep.subr.mxu0 0.0
    %1106 = vmatpush1.msra.mxu0 %v1087
    %1107 = vmatprep.subr.mxu0 0.0
    %1108 = vmatpush1.msra.mxu0 %v1088
    %1109 = vmatprep.subr.mxu0 0.0
    %1110 = vmatpush1.msra.mxu0 %v1089
    %1111 = vmatprep.subr.mxu0 0.0
    %1112 = vmatpush1.msra.mxu0 %v1090
    %1113 = vmatprep.subr.mxu0 0.0
    %1114 = vmatpush1.msra.mxu0 0.0
    %1115 = vmatprep.subr.mxu0 0.0
    %1116 = vmatpush1.msra.mxu0 0.0
    %1117 = vmatprep.subr.mxu0 0.0
    %1118 = vmatpush1.msra.mxu0 0.0
    %1119 = vmatprep.subr.mxu0 0.0
    %1120 = vmatpush1.msra.mxu0 0.0
    %1121 = vmatprep.subr.mxu0 0.0
    %1122 = vmatpush1.msra.mxu0 0.0
    %1123 = vmatprep.subr.mxu0 0.0
    %1124 = vmatpush1.msra.mxu0 0.0
    %1125 = vmatprep.subr.mxu0 0.0
    %1126 = vmatpush1.msra.mxu0 0.0
    %1127 = vmatprep.subr.mxu0 0.0
    %1128 = vmatpush1.msra.mxu0 0.0
    %1129 = vmatprep.subr.mxu0 0.0
    %1130 = vmatpush1.msra.mxu0 0.0
    %1131 = vmatprep.subr.mxu0 0.0
    %1132 = vmatpush1.msra.mxu0 0.0
    %1133 = vmatprep.subr.mxu0 0.0
    %1134 = vmatpush1.msra.mxu0 0.0
    %1135 = vmatprep.subr.mxu0 0.0
    %1136 = vmatpush1.msra.mxu0 0.0
    %1137 = vmatprep.subr.mxu0 0.0
    %1138 = vmatpush1.msra.mxu0 0.0
    %1139 = vmatprep.subr.mxu0 0.0
    %1140 = vmatpush1.msra.mxu0 0.0
    %1141 = vmatprep.subr.mxu0 0.0
    %1142 = vmatpush1.msra.mxu0 0.0
    %1143 = vmatprep.subr.mxu0 0.0
    %1144 = vmatpush1.msra.mxu0 0.0
    %1145 = vmatprep.subr.mxu0 0.0
    %1146 = vmatpush1.msra.mxu0 0.0
    %1147 = vmatprep.subr.mxu0 0.0
    %1148 = vmatpush1.msra.mxu0 0.0
    %1149 = vmatprep.subr.mxu0 0.0
    %1150 = vmatpush1.msra.mxu0 0.0
    %1151 = vmatprep.subr.mxu0 0.0
    %1152 = vmatpush1.msra.mxu0 0.0
    %1153 = vmatprep.subr.mxu0 0.0
    %1154 = vmatpush1.msra.mxu0 0.0
    %1155 = vmatprep.subr.mxu0 0.0
    %1156 = vmatpush1.msra.mxu0 0.0
    %1157 = vmatprep.subr.mxu0 0.0
    %1158 = vmatpush1.msra.mxu0 0.0
    %1159 = vmatprep.subr.mxu0 0.0
    %1160 = vmatpush1.msra.mxu0 0.0
    %1161 = vmatprep.subr.mxu0 0.0
    %1162 = vmatpush1.msra.mxu0 0.0
    %1163 = vmatprep.subr.mxu0 0.0
    %1164 = vmatpush1.msra.mxu0 0.0
    %1165 = vmatprep.subr.mxu0 0.0
    %1166 = vmatpush1.msra.mxu0 0.0
    %1167 = vmatprep.subr.mxu0 0.0
    %1168 = vmatpush1.msra.mxu0 0.0
    %1169 = vmatprep.mubr.f32.mxu0 0.0
    %1170 = vmatmul.mubr.f32.gmra.mrb[0].mxu0 %v1100
    %v1171 = vpop.f32.mrb[0].mxu0
    %v1172 = vadd.f32 %v1097, %v1171
    %v1173 = vpop.f32.mrb[0].mxu0
    %1174 = vmatprep.mubr.f32.mxu0 0.0
    %1175 = vmatmul.mubr.f32.gmra.mrb[0].mxu0 %v1103
    %v1176 = vpop.f32.mrb[0].mxu0
    %v1177 = vadd.f32 %v1097, %v1176
    %v1178 = vpop.f32.mrb[0].mxu0
    %1179 = vdwg.mxu0
    %v1180 = vmax.f32 %v1172, 0.0
    %v1181 = vmax.f32 %v1177, 0.0
    %s1182 = scalar_lea.vmem [#allocation10], 128
    %v1183 = vld [vmem:[%s1182] sm:$0xff]
    %v1184 = vld [vmem:[%s1182 + $0x8] sm:$0xff]
    %v1185 = vld [vmem:[%s1182 + $0x10] sm:$0xff]
    %v1186 = vld [vmem:[%s1182 + $0x18] sm:$0xff]
    %s1187 = scalar_lea.vmem %s9, 4
    %v1188 = vld [vmem:[%s1187] sm:$0x1]
    %v1190 = vlaneseq
    %v1191 = vshrl.u32 %v1190, 7
    %v1192 = vsub.s32 0, %v1191
    %v1193 = vrot.slane %v1188, %v1192
    %v1196 = vsel %vm296, %v1180, 0
    %v1199 = vsel %vm296, %v1181, 0
    %1201 = vmatprep.subr.mxu0 0.0
    %1202 = vmatpush1.msra.mxu0 %v1183
    %1203 = vmatprep.subr.mxu0 0.0
    %1204 = vmatpush1.msra.mxu0 %v1184
    %1205 = vmatprep.subr.mxu0 0.0
    %1206 = vmatpush1.msra.mxu0 %v1185
    %1207 = vmatprep.subr.mxu0 0.0
    %1208 = vmatpush1.msra.mxu0 %v1186
    %1209 = vmatprep.subr.mxu0 0.0
    %1210 = vmatpush1.msra.mxu0 0.0
    %1211 = vmatprep.subr.mxu0 0.0
    %1212 = vmatpush1.msra.mxu0 0.0
    %1213 = vmatprep.subr.mxu0 0.0
    %1214 = vmatpush1.msra.mxu0 0.0
    %1215 = vmatprep.subr.mxu0 0.0
    %1216 = vmatpush1.msra.mxu0 0.0
    %1217 = vmatprep.subr.mxu0 0.0
    %1218 = vmatpush1.msra.mxu0 0.0
    %1219 = vmatprep.subr.mxu0 0.0
    %1220 = vmatpush1.msra.mxu0 0.0
    %1221 = vmatprep.subr.mxu0 0.0
    %1222 = vmatpush1.msra.mxu0 0.0
    %1223 = vmatprep.subr.mxu0 0.0
    %1224 = vmatpush1.msra.mxu0 0.0
    %1225 = vmatprep.subr.mxu0 0.0
    %1226 = vmatpush1.msra.mxu0 0.0
    %1227 = vmatprep.subr.mxu0 0.0
    %1228 = vmatpush1.msra.mxu0 0.0
    %1229 = vmatprep.subr.mxu0 0.0
    %1230 = vmatpush1.msra.mxu0 0.0
    %1231 = vmatprep.subr.mxu0 0.0
    %1232 = vmatpush1.msra.mxu0 0.0
    %1233 = vmatprep.subr.mxu0 0.0
    %1234 = vmatpush1.msra.mxu0 0.0
    %1235 = vmatprep.subr.mxu0 0.0
    %1236 = vmatpush1.msra.mxu0 0.0
    %1237 = vmatprep.subr.mxu0 0.0
    %1238 = vmatpush1.msra.mxu0 0.0
    %1239 = vmatprep.subr.mxu0 0.0
    %1240 = vmatpush1.msra.mxu0 0.0
    %1241 = vmatprep.subr.mxu0 0.0
    %1242 = vmatpush1.msra.mxu0 0.0
    %1243 = vmatprep.subr.mxu0 0.0
    %1244 = vmatpush1.msra.mxu0 0.0
    %1245 = vmatprep.subr.mxu0 0.0
    %1246 = vmatpush1.msra.mxu0 0.0
    %1247 = vmatprep.subr.mxu0 0.0
    %1248 = vmatpush1.msra.mxu0 0.0
    %1249 = vmatprep.subr.mxu0 0.0
    %1250 = vmatpush1.msra.mxu0 0.0
    %1251 = vmatprep.subr.mxu0 0.0
    %1252 = vmatpush1.msra.mxu0 0.0
    %1253 = vmatprep.subr.mxu0 0.0
    %1254 = vmatpush1.msra.mxu0 0.0
    %1255 = vmatprep.subr.mxu0 0.0
    %1256 = vmatpush1.msra.mxu0 0.0
    %1257 = vmatprep.subr.mxu0 0.0
    %1258 = vmatpush1.msra.mxu0 0.0
    %1259 = vmatprep.subr.mxu0 0.0
    %1260 = vmatpush1.msra.mxu0 0.0
    %1261 = vmatprep.subr.mxu0 0.0
    %1262 = vmatpush1.msra.mxu0 0.0
    %1263 = vmatprep.subr.mxu0 0.0
    %1264 = vmatpush1.msra.mxu0 0.0
    %1265 = vmatprep.mubr.f32.mxu0 0.0
    %1266 = vmatmul.mubr.f32.gmra.mrb[0].mxu0 %v1196
    %v1267 = vpop.f32.mrb[0].mxu0
    %v1268 = vadd.f32 %v1193, %v1267
    %v1269 = vpop.f32.mrb[0].mxu0
    %1270 = vmatprep.mubr.f32.mxu0 0.0
    %1271 = vmatmul.mubr.f32.gmra.mrb[0].mxu0 %v1199
    %v1272 = vpop.f32.mrb[0].mxu0
    %v1273 = vadd.f32 %v1193, %v1272
    %v1274 = vpop.f32.mrb[0].mxu0
    %1275 = vdwg.mxu0
    %v1276 = vadd.f32 %v1082, %v1268
    %v1277 = vadd.f32 %v1083, %v1273
    %v1278 = vmax.f32 %v1276, 0.0
    %v1279 = vmax.f32 %v1277, 0.0
    %v1280 = vld [vmem:[%s10] sm:$0x1]
    %v1281 = vlaneseq
    %v1282 = vshrl.u32 %v1281, 7
    %v1283 = vsub.s32 0, %v1282
    %v1284 = vrot.slane %v1280, %v1283
    %v1285 = vmul.f32 %v1278, %v1284
    %v1286 = vmul.f32 %v1279, %v1284
    %v1287 = vsel %vm296, %v1285, 0.0
    %1288 = vadd.xlane.f32.xlu0 %v1287
    %v1289 = vpop.xlane.xlu0 %1288
    %v1290 = vsel %vm296, %v1286, 0.0
    %1291 = vadd.xlane.f32.xlu0 %v1290
    %v1292 = vpop.xlane.xlu0 %1291
    %v1293 = vld [vmem:[%s10 + $0x1] sm:$0x1]
    %v1294 = vlaneseq
    %v1295 = vshrl.u32 %v1294, 7
    %v1296 = vsub.s32 0, %v1295
    %v1297 = vrot.slane %v1293, %v1296
    %v1298 = vmul.f32 %v1278, %v1297
    %v1299 = vmul.f32 %v1279, %v1297
    %v1300 = vsel %vm296, %v1298, 0.0
    %1301 = vadd.xlane.f32.xlu0 %v1300
    %v1302 = vpop.xlane.xlu0 %1301
    %v1303 = vsel %vm296, %v1299, 0.0
    %1304 = vadd.xlane.f32.xlu0 %v1303
    %v1305 = vpop.xlane.xlu0 %1304
    %v1306 = vld [vmem:[%s10 + $0x2] sm:$0x1]
    %v1307 = vlaneseq
    %v1308 = vshrl.u32 %v1307, 7
    %v1309 = vsub.s32 0, %v1308
    %v1310 = vrot.slane %v1306, %v1309
    %v1311 = vmul.f32 %v1278, %v1310
    %v1312 = vmul.f32 %v1279, %v1310
    %v1313 = vsel %vm296, %v1311, 0.0
    %1314 = vadd.xlane.f32.xlu0 %v1313
    %v1315 = vpop.xlane.xlu0 %1314
    %v1316 = vsel %vm296, %v1312, 0.0
    %1317 = vadd.xlane.f32.xlu0 %v1316
    %v1318 = vpop.xlane.xlu0 %1317
    %v1319 = vld [vmem:[%s10 + $0x3] sm:$0x1]
    %v1320 = vlaneseq
    %v1321 = vshrl.u32 %v1320, 7
    %v1322 = vsub.s32 0, %v1321
    %v1323 = vrot.slane %v1319, %v1322
    %v1324 = vmul.f32 %v1278, %v1323
    %v1325 = vmul.f32 %v1279, %v1323
    %v1326 = vsel %vm296, %v1324, 0.0
    %1327 = vadd.xlane.f32.xlu0 %v1326
    %v1328 = vpop.xlane.xlu0 %1327
    %v1329 = vsel %vm296, %v1325, 0.0
    %1330 = vadd.xlane.f32.xlu0 %v1329
    %v1331 = vpop.xlane.xlu0 %1330
    %vm1332 = vcmask 7168
    %v1333 = vsel %vm1332, %v1289, %v1302
    %v1334 = vsel %vm1332, %v1292, %v1305
    %vm1335 = vcmask 15360
    %v1336 = vsel %vm1335, %v1333, %v1315
    %v1337 = vsel %vm1335, %v1334, %v1318
    %vm1338 = vcmask 23552
    %v1339 = vsel %vm1338, %v1336, %v1328
    %v1340 = vsel %vm1338, %v1337, %v1331
    %v1341 = vld [vmem:[%s11] sm:$0x1]
    %v1343 = vlaneseq
    %v1344 = vshrl.u32 %v1343, 7
    %v1345 = vsub.s32 0, %v1344
    %v1346 = vrot.slane %v1341, %v1345
    %v1348 = vadd.f32 %v1339, %v1346
    %v1349 = vadd.f32 %v1340, %v1346
    %vm1350 = vcmask 31744
    %1351 = vst.msk [vmem:[%s12] sm:$0xff] %vm1350, %v1348
    %1352 = vst.msk [vmem:[%s12 + $0x8] sm:$0xff] %vm1350, %v1349
    // Predicated region
    $region74: #{tpu_custom_call.1} parent=1 // pred_check
      _
    $region75: #{tpu_custom_call.1} parent=1 // pred_check_branch
      %1354 = sbr.rel (0) target = $region77
    $region76: #{tpu_custom_call.1} parent=1 // pred_region
      _
    $region77: #{tpu_custom_call.1} parent=1 // pred_fallthru
      _
    // Predicated region
    $region78: #{tpu_custom_call.1} parent=1 // pred_check
      _
    $region79: #{tpu_custom_call.1} parent=1 // pred_check_branch
      %1356 = sbr.rel (0) target = $region81
    $region80: #{tpu_custom_call.1} parent=1 // pred_region
      _
    $region81: #{tpu_custom_call.1} parent=1 // pred_fallthru
      _
    %1357 = vsyncpa [#allocation3], 1
    %1358 = vsyncpa [#allocation5], 1
    %1359 = vsyncpa [#allocation8], 1
    %1360 = vsyncpa [#allocation11], 1

</llo_original>
